<compile_context>
chip_gen: v7x
topology: tpu7x:2x2x1
jax: 0.10.0
libtpu: 0.0.40
codegen_flags: <defaults>
</compile_context>

<pallas_src>
import functools

import jax
import jax.numpy as jnp
from jax.experimental import pallas as pl
from jax.experimental.pallas import tpu as pltpu


def _round_up(x, m):
    return ((x + m - 1) // m) * m


def _mlp_kernel(x_ref, w1_ref, b1_ref, w2_ref, b2_ref, w3_ref, b3_ref,
                logits_ref, probas_ref):
    compute_dtype = w1_ref.dtype

    # x may arrive as f32 (no-pad fast path) or bf16 (padded path); either way
    # the MXU operand is bf16 with f32 accumulation.
    x = x_ref[...].astype(compute_dtype)

    # Layer 1: Linear + sigmoid (bias add + activation in f32).
    h1 = jnp.dot(x, w1_ref[...], preferred_element_type=jnp.float32) + b1_ref[...]
    h1 = jax.nn.sigmoid(h1)

    # Layer 2: Linear + sigmoid.
    h2 = jnp.dot(h1.astype(compute_dtype), w2_ref[...],
                 preferred_element_type=jnp.float32) + b2_ref[...]
    h2 = jax.nn.sigmoid(h2)

    # Output layer: Linear.  Padded class columns carry a -1e30 bias, so they
    # vanish under softmax below and are sliced off in the wrapper.
    logits = jnp.dot(h2.astype(compute_dtype), w3_ref[...],
                     preferred_element_type=jnp.float32) + b3_ref[...]
    logits_ref[...] = logits.astype(logits_ref.dtype)

    # Numerically stable softmax over the class dim (exact division; the
    # denominator is only (TB, 1) so approx reciprocal buys nothing).
    m = jnp.max(logits, axis=1, keepdims=True)
    e = jnp.exp(logits - m)
    s = jnp.sum(e, axis=1, keepdims=True)
    probas_ref[...] = (e / s).astype(probas_ref.dtype)


def classify_forward(x, params, *, num_classes, block_rows=1024,
                     out_dtype=jnp.float32):
    """x: [B, F] float32.  params: padded params from init_params()."""
    B, F = x.shape
    compute_dtype = params["w1_t"].dtype
    F_w, H1_pad = params["w1_t"].shape
    H2_pad = params["w2_t"].shape[1]
    C_pad = params["w3_t"].shape[1]
    C = num_classes
    assert F == F_w, (F, F_w)

    # Batch tile: multiple of 8 sublanes, and sized so the grid has >= 2 steps
    # whenever B > 8 (both v7x TensorCores get work via the "parallel" axis).
    TB = max(8, min(block_rows, _round_up(pl.cdiv(B, 2), 8)))
    B_pad = _round_up(B, TB)

    if B_pad != B:
        # Single fused cast+pad pass (write 2 B/elem) instead of an f32 padded
        # copy followed by a second bf16 copy.
        x_in = jnp.pad(x.astype(compute_dtype), ((0, B_pad - B), (0, 0)))
    else:
        # No padding needed: pass f32 straight through, cast in-kernel.
        x_in = x

    grid = (B_pad // TB,)
    const = lambda i: (0, 0)  # weights/biases: one block, VMEM-resident

    logits_p, probas_p = pl.pallas_call(
        _mlp_kernel,
        out_shape=(
            jax.ShapeDtypeStruct((B_pad, C_pad), out_dtype),
            jax.ShapeDtypeStruct((B_pad, C_pad), out_dtype),
        ),
        grid=grid,
        in_specs=[
            # x block last dim == full array dim F (legal even though F is not
            # a multiple of 128); MXU pads K internally.
            pl.BlockSpec((TB, F), lambda i: (i, 0)),
            pl.BlockSpec((F, H1_pad), const),
            pl.BlockSpec((1, H1_pad), const),
            pl.BlockSpec((H1_pad, H2_pad), const),
            pl.BlockSpec((1, H2_pad), const),
            pl.BlockSpec((H2_pad, C_pad), const),
            pl.BlockSpec((1, C_pad), const),
        ],
        out_specs=(
            pl.BlockSpec((TB, C_pad), lambda i: (i, 0)),
            pl.BlockSpec((TB, C_pad), lambda i: (i, 0)),
        ),
        compiler_params=pltpu.CompilerParams(
            dimension_semantics=("parallel",)),
    )(x_in, params["w1_t"], params["b1"],
      params["w2_t"], params["b2"],
      params["w3_t"], params["b3"])

    # Slice padding (batch rows + class columns) back off immediately.
    return logits_p[:B, :C], probas_p[:B, :C]


def init_params(key, num_features, num_hidden, num_classes,
                compute_dtype=jnp.bfloat16):
    """PyTorch-Linear-style init (uniform +-1/sqrt(fan_in)).

    Returns (padded_params, ref_params).  Padded weights are [in, out_pad]
    (layer-1 input dim kept unpadded) in `compute_dtype`; biases are
    [1, out_pad] in f32.  ref_params are the unpadded f32 originals.
    """
    h1, h2 = num_hidden
    ks = jax.random.split(key, 6)

    def linear(kw, kb, fan_in, fan_out):
        bound = 1.0 / jnp.sqrt(jnp.float32(fan_in))
        w_t = jax.random.uniform(kw, (fan_in, fan_out), jnp.float32, -bound, bound)
        b = jax.random.uniform(kb, (1, fan_out), jnp.float32, -bound, bound)
        return w_t, b

    w1_t, b1 = linear(ks[0], ks[1], num_features, h1)
    w2_t, b2 = linear(ks[2], ks[3], h1, h2)
    w3_t, b3 = linear(ks[4], ks[5], h2, num_classes)

    H1_pad = _round_up(h1, 128)
    H2_pad = _round_up(h2, 128)
    C_pad = _round_up(num_classes, 128)

    def pad_w(w, rp, cp):
        out = jnp.zeros((rp, cp), jnp.float32).at[:w.shape[0], :w.shape[1]].set(w)
        return out.astype(compute_dtype)

    def pad_b(b, cp, fill=0.0):
        return jnp.full((1, cp), fill, jnp.float32).at[:, :b.shape[1]].set(b)

    params = {
        # Layer 1: input dim stays at num_features (no F padding anywhere).
        "w1_t": pad_w(w1_t, num_features, H1_pad), "b1": pad_b(b1, H1_pad),
        # Padded h1 columns are sigmoid(0)=0.5 but hit zero-padded w2 rows,
        # so they contribute nothing; same for h2 -> w3.
        "w2_t": pad_w(w2_t, H1_pad, H2_pad), "b2": pad_b(b2, H2_pad),
        # Padded class columns: zero weights + -1e30 bias -> exp(.) == 0.
        "w3_t": pad_w(w3_t, H2_pad, C_pad), "b3": pad_b(b3, C_pad, fill=-1e30),
    }
    ref = {"w1_t": w1_t, "b1": b1, "w2_t": w2_t, "b2": b2,
           "w3_t": w3_t, "b3": b3}
    return params, ref


def reference_forward(x, ref_p, compute_dtype=jnp.bfloat16):
    """Plain-JAX reference with the same mixed precision as the kernel."""
    def lin(a, w, b):
        return jnp.dot(a.astype(compute_dtype), w.astype(compute_dtype),
                       preferred_element_type=jnp.float32) + b
    h1 = jax.nn.sigmoid(lin(x, ref_p["w1_t"], ref_p["b1"]))
    h2 = jax.nn.sigmoid(lin(h1, ref_p["w2_t"], ref_p["b2"]))
    logits = lin(h2, ref_p["w3_t"], ref_p["b3"])
    probas = jax.nn.softmax(logits, axis=1)
    return logits, probas


if __name__ == "__main__":
    # Module-default feature/hidden/class sizes, small batch.
    B = 16
    F_IN = 316
    HIDDEN = [316, 316]
    C = 6

    key = jax.random.PRNGKey(0)
    k_x, k_p = jax.random.split(key)
    x = jax.random.normal(k_x, (B, F_IN), jnp.float32)
    params, ref_params = init_params(k_p, F_IN, HIDDEN, C)

    # num_classes bound via partial -> stays a static Python int under jit.
    fwd = jax.jit(functools.partial(classify_forward, num_classes=C,
                                    block_rows=1024))
    logits, probas = fwd(x, params)
    jax.block_until_ready((logits, probas))

    # Sanity check against a plain-JAX reference (same bf16 matmul precision).
    ref_logits, ref_probas = reference_forward(x, ref_params)
    assert logits.shape == (B, C) and probas.shape == (B, C)
    assert jnp.allclose(logits, ref_logits, atol=5e-3, rtol=5e-3), (
        float(jnp.max(jnp.abs(logits - ref_logits))))
    assert jnp.allclose(probas, ref_probas, atol=5e-3, rtol=5e-3), (
        float(jnp.max(jnp.abs(probas - ref_probas))))
    assert jnp.allclose(jnp.sum(probas, axis=1), 1.0, atol=1e-2)

    print("KERNEL_OK")
</pallas_src>

<mosaic_0001>
module attributes {stable_mosaic.version = 11 : i64} {
  func.func @_mlp_kernel(%arg0: i32, %arg1: memref<8x316xf32, #tpu.memory_space<vmem>>, %arg2: memref<316x384xbf16, #tpu.memory_space<vmem>>, %arg3: memref<1x384xf32, #tpu.memory_space<vmem>>, %arg4: memref<384x384xbf16, #tpu.memory_space<vmem>>, %arg5: memref<1x384xf32, #tpu.memory_space<vmem>>, %arg6: memref<384x128xbf16, #tpu.memory_space<vmem>>, %arg7: memref<1x128xf32, #tpu.memory_space<vmem>>, %arg8: memref<8x128xf32, #tpu.memory_space<vmem>>, %arg9: memref<8x128xf32, #tpu.memory_space<vmem>>) attributes {dimension_semantics = [#tpu.dimension_semantics<parallel>], iteration_bounds = array<i64: 2>, scalar_prefetch = 0 : i64, scratch_operands = 0 : i64, tpu.core_type = #tpu.core_type<tc>, window_params = [{transform_indices = @transform_0, window_bounds = array<i64: 8, 316>}, {pipeline_mode = #tpu.pipeline_mode<synchronous>, transform_indices = @transform_1, window_bounds = array<i64: 316, 384>}, {pipeline_mode = #tpu.pipeline_mode<synchronous>, transform_indices = @transform_2, window_bounds = array<i64: 1, 384>}, {pipeline_mode = #tpu.pipeline_mode<synchronous>, transform_indices = @transform_3, window_bounds = array<i64: 384, 384>}, {pipeline_mode = #tpu.pipeline_mode<synchronous>, transform_indices = @transform_4, window_bounds = array<i64: 1, 384>}, {pipeline_mode = #tpu.pipeline_mode<synchronous>, transform_indices = @transform_5, window_bounds = array<i64: 384, 128>}, {pipeline_mode = #tpu.pipeline_mode<synchronous>, transform_indices = @transform_6, window_bounds = array<i64: 1, 128>}, {transform_indices = @transform_7, window_bounds = array<i64: 8, 128>}, {transform_indices = @transform_8, window_bounds = array<i64: 8, 128>}]} {
    %c0 = arith.constant 0 : index
    %c0_0 = arith.constant 0 : index
    %0 = vector.load %arg1[%c0, %c0_0] : memref<8x316xf32, #tpu.memory_space<vmem>>, vector<8x316xf32>
    %1 = arith.truncf %0 : vector<8x316xf32> to vector<8x316xbf16>
    %c0_1 = arith.constant 0 : index
    %c0_2 = arith.constant 0 : index
    %2 = vector.load %arg2[%c0_1, %c0_2] : memref<316x384xbf16, #tpu.memory_space<vmem>>, vector<316x384xbf16>
    %cst = arith.constant dense<0.000000e+00> : vector<8x384xf32>
    %3 = tpu.matmul %1, %2, %cst {dimension_numbers = #tpu.dot_dimension_numbers<[1], [0], [0], [1], [0, 0, 1, 1], [], []>} : vector<8x316xbf16>, vector<316x384xbf16>, vector<8x384xf32> -> vector<8x384xf32>
    %c0_3 = arith.constant 0 : index
    %c0_4 = arith.constant 0 : index
    %4 = vector.load %arg3[%c0_3, %c0_4] : memref<1x384xf32, #tpu.memory_space<vmem>>, vector<1x384xf32>
    %5 = vector.broadcast %4 : vector<1x384xf32> to vector<8x384xf32>
    %6 = arith.addf %3, %5 : vector<8x384xf32>
    %7 = arith.negf %6 : vector<8x384xf32>
    %8 = math.exp %7 : vector<8x384xf32>
    %cst_5 = arith.constant 1.000000e+00 : f32
    %9 = vector.broadcast %cst_5 : f32 to vector<8x384xf32>
    %10 = arith.addf %9, %8 : vector<8x384xf32>
    %11 = arith.divf %9, %10 : vector<8x384xf32>
    %12 = arith.truncf %11 : vector<8x384xf32> to vector<8x384xbf16>
    %c0_6 = arith.constant 0 : index
    %c0_7 = arith.constant 0 : index
    %13 = vector.load %arg4[%c0_6, %c0_7] : memref<384x384xbf16, #tpu.memory_space<vmem>>, vector<384x384xbf16>
    %cst_8 = arith.constant dense<0.000000e+00> : vector<8x384xf32>
    %14 = tpu.matmul %12, %13, %cst_8 {dimension_numbers = #tpu.dot_dimension_numbers<[1], [0], [0], [1], [0, 0, 1, 1], [], []>} : vector<8x384xbf16>, vector<384x384xbf16>, vector<8x384xf32> -> vector<8x384xf32>
    %c0_9 = arith.constant 0 : index
    %c0_10 = arith.constant 0 : index
    %15 = vector.load %arg5[%c0_9, %c0_10] : memref<1x384xf32, #tpu.memory_space<vmem>>, vector<1x384xf32>
    %16 = vector.broadcast %15 : vector<1x384xf32> to vector<8x384xf32>
    %17 = arith.addf %14, %16 : vector<8x384xf32>
    %18 = arith.negf %17 : vector<8x384xf32>
    %19 = math.exp %18 : vector<8x384xf32>
    %cst_11 = arith.constant 1.000000e+00 : f32
    %20 = vector.broadcast %cst_11 : f32 to vector<8x384xf32>
    %21 = arith.addf %20, %19 : vector<8x384xf32>
    %22 = arith.divf %20, %21 : vector<8x384xf32>
    %23 = arith.truncf %22 : vector<8x384xf32> to vector<8x384xbf16>
    %c0_12 = arith.constant 0 : index
    %c0_13 = arith.constant 0 : index
    %24 = vector.load %arg6[%c0_12, %c0_13] : memref<384x128xbf16, #tpu.memory_space<vmem>>, vector<384x128xbf16>
    %cst_14 = arith.constant dense<0.000000e+00> : vector<8x128xf32>
    %25 = tpu.matmul %23, %24, %cst_14 {dimension_numbers = #tpu.dot_dimension_numbers<[1], [0], [0], [1], [0, 0, 1, 1], [], []>} : vector<8x384xbf16>, vector<384x128xbf16>, vector<8x128xf32> -> vector<8x128xf32>
    %c0_15 = arith.constant 0 : index
    %c0_16 = arith.constant 0 : index
    %26 = vector.load %arg7[%c0_15, %c0_16] : memref<1x128xf32, #tpu.memory_space<vmem>>, vector<1x128xf32>
    %27 = vector.broadcast %26 : vector<1x128xf32> to vector<8x128xf32>
    %28 = arith.addf %25, %27 : vector<8x128xf32>
    %c0_17 = arith.constant 0 : index
    %c0_18 = arith.constant 0 : index
    %29 = vector.load %arg8[%c0_17, %c0_18] : memref<8x128xf32, #tpu.memory_space<vmem>>, vector<8x128xf32>
    tpu.vector_store %arg8[%c0_17, %c0_18], %28 {strides = array<i32>} : memref<8x128xf32, #tpu.memory_space<vmem>>, vector<8x128xf32>,
    %cst_19 = arith.constant dense<0xFF800000> : vector<8xf32>
    %30 = vector.multi_reduction <maximumf>, %28, %cst_19 [1] : vector<8x128xf32> to vector<8xf32>
    %31 = vector.shape_cast %30 : vector<8xf32> to vector<8x1xf32>
    %32 = vector.broadcast %31 : vector<8x1xf32> to vector<8x128xf32>
    %33 = arith.subf %28, %32 : vector<8x128xf32>
    %34 = math.exp %33 : vector<8x128xf32>
    %cst_20 = arith.constant dense<0.000000e+00> : vector<8xf32>
    %35 = vector.multi_reduction <add>, %34, %cst_20 [1] : vector<8x128xf32> to vector<8xf32>
    %36 = vector.shape_cast %35 : vector<8xf32> to vector<8x1xf32>
    %37 = vector.broadcast %36 : vector<8x1xf32> to vector<8x128xf32>
    %38 = arith.divf %34, %37 : vector<8x128xf32>
    %c0_21 = arith.constant 0 : index
    %c0_22 = arith.constant 0 : index
    %39 = vector.load %arg9[%c0_21, %c0_22] : memref<8x128xf32, #tpu.memory_space<vmem>>, vector<8x128xf32>
    tpu.vector_store %arg9[%c0_21, %c0_22], %38 {strides = array<i32>} : memref<8x128xf32, #tpu.memory_space<vmem>>, vector<8x128xf32>,
    return
  }
  func.func @transform_0(%arg0: i32) -> (i32, i32) {
    %c0_i32 = arith.constant 0 : i32
    %c0_i32_0 = arith.constant 0 : i32
    return %arg0, %c0_i32 : i32, i32
  }
  func.func @transform_1(%arg0: i32) -> (i32, i32) {
    %c0_i32 = arith.constant 0 : i32
    %c0_i32_0 = arith.constant 0 : i32
    %c0_i32_1 = arith.constant 0 : i32
    return %c0_i32, %c0_i32_0 : i32, i32
  }
  func.func @transform_2(%arg0: i32) -> (i32, i32) {
    %c0_i32 = arith.constant 0 : i32
    %c0_i32_0 = arith.constant 0 : i32
    %c0_i32_1 = arith.constant 0 : i32
    return %c0_i32, %c0_i32_0 : i32, i32
  }
  func.func @transform_3(%arg0: i32) -> (i32, i32) {
    %c0_i32 = arith.constant 0 : i32
    %c0_i32_0 = arith.constant 0 : i32
    %c0_i32_1 = arith.constant 0 : i32
    return %c0_i32, %c0_i32_0 : i32, i32
  }
  func.func @transform_4(%arg0: i32) -> (i32, i32) {
    %c0_i32 = arith.constant 0 : i32
    %c0_i32_0 = arith.constant 0 : i32
    %c0_i32_1 = arith.constant 0 : i32
    return %c0_i32, %c0_i32_0 : i32, i32
  }
  func.func @transform_5(%arg0: i32) -> (i32, i32) {
    %c0_i32 = arith.constant 0 : i32
    %c0_i32_0 = arith.constant 0 : i32
    %c0_i32_1 = arith.constant 0 : i32
    return %c0_i32, %c0_i32_0 : i32, i32
  }
  func.func @transform_6(%arg0: i32) -> (i32, i32) {
    %c0_i32 = arith.constant 0 : i32
    %c0_i32_0 = arith.constant 0 : i32
    %c0_i32_1 = arith.constant 0 : i32
    return %c0_i32, %c0_i32_0 : i32, i32
  }
  func.func @transform_7(%arg0: i32) -> (i32, i32) {
    %c0_i32 = arith.constant 0 : i32
    %c0_i32_0 = arith.constant 0 : i32
    return %arg0, %c0_i32 : i32, i32
  }
  func.func @transform_8(%arg0: i32) -> (i32, i32) {
    %c0_i32 = arith.constant 0 : i32
    %c0_i32_0 = arith.constant 0 : i32
    return %arg0, %c0_i32 : i32, i32
  }
}

</mosaic_0001>

<llo_original>
// kernel: classify_forward.1
$region0: #{classify_forward.1}
  #allocation0 [shape = 'u32[]', space=smem, size = 0x4, offset = 0x4, fixed_abs, tag = 'smem constant byte address 0x4 - core index']
  #allocation1 [shape = 'u32[144,128]{1,0:T(1,128)}', space=vmem, size = 0x12000, scoped, tag = 'internal scratch']
  %s0 = inlined_call_operand.hbm [shape: f32[16,316], index: 0, kind: input, shape index: {}]
  %s1 = inlined_call_operand.hbm [shape: bf16[316,384], index: 1, kind: input, shape index: {}]
  %s2 = inlined_call_operand.vmem [shape: f32[1,384], index: 2, kind: input, shape index: {}]
  %s3 = inlined_call_operand.hbm [shape: bf16[384,384], index: 3, kind: input, shape index: {}]
  %s4 = inlined_call_operand.vmem [shape: f32[1,384], index: 4, kind: input, shape index: {}]
  %s5 = inlined_call_operand.hbm [shape: bf16[384,128], index: 5, kind: input, shape index: {}]
  %s6 = inlined_call_operand.vmem [shape: f32[1,128], index: 6, kind: input, shape index: {}]
  %s7 = inlined_call_operand.vmem [shape: f32[16,128], index: 7, kind: output, shape index: {0}]
  %s8 = inlined_call_operand.vmem [shape: f32[16,128], index: 8, kind: output, shape index: {1}]
  %9 = xla_tuple %s7, %s8
  %s10 = sld [smem:[#allocation0]]
  $region85: #{classify_forward.1} parent=0
    _
  %s12 = ssub.s32 1, %s10
  %s13 = scalar_select 0, %s12, %s10
  $region1: #{classify_forward.1} parent=0
    #allocation2 [shape = 'u8[24576]{0}', space=vmem, size = 0x6000, scoped, tag = 'input window, operand 0']
    #allocation3 [shape = 's32[2]{0}', space=sflag, size = 0x8, scoped, tag = 'scoped memory for classify_forward.1']
    #allocation4 [shape = 'u8[245760]{0}', space=vmem, size = 0x3c000, scoped, tag = 'input window, operand 1, single buffered']
    #allocation5 [shape = 's32[1]{0}', space=sflag, size = 0x4, scoped, tag = 'scoped memory for classify_forward.1']
    #allocation6 [shape = 'u8[294912]{0}', space=vmem, size = 0x48000, scoped, tag = 'input window, operand 3, single buffered']
    #allocation7 [shape = 'u8[98304]{0}', space=vmem, size = 0x18000, scoped, tag = 'input window, operand 5, single buffered']
    #allocation8 [shape = 's32[1]{0}', space=sflag, size = 0x4, scoped, tag = 'scoped memory for classify_forward.1']
    %14 = vsyncpa [#allocation3], 0
    %s15 = scalar_lea.sflag [#allocation3], 1
    %16 = vsyncpa %s15, 0
    %17 = vsyncpa [#allocation5], 0
    %18 = vsyncpa [#allocation8], 0
    loop: start=0, step=1, limit=4
    $region2: #{classify_forward.1} parent=1 // loop_pre_header
      _
    $region3: #{classify_forward.1} parent=1 // loop_header
      %s20 = sphi 0, %s24
      %p21 = scmp.ge.s32.totalorder %s20, 4
      %s30 = sphi 0, %s32
      %s33 = sphi 0, %s30
      %s34 = sphi 0, %s33
      %s50 = sphi 0, %s34
      %s54 = sphi 0, %s54
      %s56 = sphi 0, %s54
      %s57 = sphi 0, %s56
      %s71 = sphi 0, %s57
      %s75 = sphi 0, %s75
      %s77 = sphi 0, %s75
      %s78 = sphi 0, %s77
      %s92 = sphi 0, %s78
      %s96 = sphi 0, %s96
      %s98 = sphi 0, %s96
      %s99 = sphi 0, %s98
      %s113 = sphi 0, %s99
      %s117 = sphi 0, %s117
      %s119 = sphi 0, %s117
      %s120 = sphi 0, %s119
      %s134 = sphi 0, %s120
      %s138 = sphi 0, %s138
      %s140 = sphi 0, %s138
      %s141 = sphi 0, %s140
      %s155 = sphi 0, %s141
      %s159 = sphi 0, %s159
      %s161 = sphi 0, %s159
      %s162 = sphi 0, %s161
      %s176 = sphi 0, %s162
      %s182 = sphi 0, %s184
      %s185 = sphi 0, %s182
      %s186 = sphi 0, %s185
      %s202 = sphi 0, %s186
      %s208 = sphi 0, %s210
      %s211 = sphi 0, %s208
      %s212 = sphi 0, %s211
      %s228 = sphi 0, %s212
    $region4: #{classify_forward.1} parent=1 // loop_header_branch
      %23 = sbr.rel (%p21) target = $region8
    $region5: #{classify_forward.1} parent=1 // loop_body
      %s25 = ssub.s32 %s20, 1
      %s26 = ssub.s32 %s20, 2
      %s27 = sadd.s32 %s20, 1
      %s28 = ssub.s32 %s20, %s27
      %p29 = scmp.eq.s32.totalorder %s28, 0
      %s31 = sadd.s32 %s30, 1
      %s32 = scalar_select %p29, %s30, %s31
      %p35 = pneg %p29
      %p36 = scmp.eq.s32.totalorder %s20, 1
      %p37 = por %p35, %p36
      %p38 = scmp.ne.s32.totalorder %s30, %s33
      %p39 = scmp.eq.s32.totalorder %s20, 0
      %p40 = por %p38, %p39
      %p41 = scmp.ne.s32.totalorder %s30, %s33
      %p42 = scmp.eq.s32.totalorder %s25, 1
      %p43 = por %p41, %p42
      %p44 = scmp.ne.s32.totalorder %s33, %s34
      %p45 = scmp.eq.s32.totalorder %s25, 0
      %p46 = por %p44, %p45
      %p47 = scmp.ne.s32.totalorder %s33, %s34
      %p48 = scmp.eq.s32.totalorder %s26, 1
      %p49 = por %p47, %p48
      %p51 = scmp.ne.s32.totalorder %s34, %s50
      %p52 = scmp.eq.s32.totalorder %s26, 0
      %p53 = por %p51, %p52
      %s55 = sadd.s32 %s54, 1
      %p58 = scmp.eq.s32.totalorder %s20, 1
      %p59 = scmp.ne.s32.totalorder %s54, %s56
      %p60 = scmp.eq.s32.totalorder %s20, 0
      %p61 = por %p59, %p60
      %p62 = scmp.ne.s32.totalorder %s54, %s56
      %p63 = scmp.eq.s32.totalorder %s25, 1
      %p64 = por %p62, %p63
      %p65 = scmp.ne.s32.totalorder %s56, %s57
      %p66 = scmp.eq.s32.totalorder %s25, 0
      %p67 = por %p65, %p66
      %p68 = scmp.ne.s32.totalorder %s56, %s57
      %p69 = scmp.eq.s32.totalorder %s26, 1
      %p70 = por %p68, %p69
      %p72 = scmp.ne.s32.totalorder %s57, %s71
      %p73 = scmp.eq.s32.totalorder %s26, 0
      %p74 = por %p72, %p73
      %s76 = sadd.s32 %s75, 1
      %p79 = scmp.eq.s32.totalorder %s20, 1
      %p80 = scmp.ne.s32.totalorder %s75, %s77
      %p81 = scmp.eq.s32.totalorder %s20, 0
      %p82 = por %p80, %p81
      %p83 = scmp.ne.s32.totalorder %s75, %s77
      %p84 = scmp.eq.s32.totalorder %s25, 1
      %p85 = por %p83, %p84
      %p86 = scmp.ne.s32.totalorder %s77, %s78
      %p87 = scmp.eq.s32.totalorder %s25, 0
      %p88 = por %p86, %p87
      %p89 = scmp.ne.s32.totalorder %s77, %s78
      %p90 = scmp.eq.s32.totalorder %s26, 1
      %p91 = por %p89, %p90
      %p93 = scmp.ne.s32.totalorder %s78, %s92
      %p94 = scmp.eq.s32.totalorder %s26, 0
      %p95 = por %p93, %p94
      %s97 = sadd.s32 %s96, 1
      %p100 = scmp.eq.s32.totalorder %s20, 1
      %p101 = scmp.ne.s32.totalorder %s96, %s98
      %p102 = scmp.eq.s32.totalorder %s20, 0
      %p103 = por %p101, %p102
      %p104 = scmp.ne.s32.totalorder %s96, %s98
      %p105 = scmp.eq.s32.totalorder %s25, 1
      %p106 = por %p104, %p105
      %p107 = scmp.ne.s32.totalorder %s98, %s99
      %p108 = scmp.eq.s32.totalorder %s25, 0
      %p109 = por %p107, %p108
      %p110 = scmp.ne.s32.totalorder %s98, %s99
      %p111 = scmp.eq.s32.totalorder %s26, 1
      %p112 = por %p110, %p111
      %p114 = scmp.ne.s32.totalorder %s99, %s113
      %p115 = scmp.eq.s32.totalorder %s26, 0
      %p116 = por %p114, %p115
      %s118 = sadd.s32 %s117, 1
      %p121 = scmp.eq.s32.totalorder %s20, 1
      %p122 = scmp.ne.s32.totalorder %s117, %s119
      %p123 = scmp.eq.s32.totalorder %s20, 0
      %p124 = por %p122, %p123
      %p125 = scmp.ne.s32.totalorder %s117, %s119
      %p126 = scmp.eq.s32.totalorder %s25, 1
      %p127 = por %p125, %p126
      %p128 = scmp.ne.s32.totalorder %s119, %s120
      %p129 = scmp.eq.s32.totalorder %s25, 0
      %p130 = por %p128, %p129
      %p131 = scmp.ne.s32.totalorder %s119, %s120
      %p132 = scmp.eq.s32.totalorder %s26, 1
      %p133 = por %p131, %p132
      %p135 = scmp.ne.s32.totalorder %s120, %s134
      %p136 = scmp.eq.s32.totalorder %s26, 0
      %p137 = por %p135, %p136
      %s139 = sadd.s32 %s138, 1
      %p142 = scmp.eq.s32.totalorder %s20, 1
      %p143 = scmp.ne.s32.totalorder %s138, %s140
      %p144 = scmp.eq.s32.totalorder %s20, 0
      %p145 = por %p143, %p144
      %p146 = scmp.ne.s32.totalorder %s138, %s140
      %p147 = scmp.eq.s32.totalorder %s25, 1
      %p148 = por %p146, %p147
      %p149 = scmp.ne.s32.totalorder %s140, %s141
      %p150 = scmp.eq.s32.totalorder %s25, 0
      %p151 = por %p149, %p150
      %p152 = scmp.ne.s32.totalorder %s140, %s141
      %p153 = scmp.eq.s32.totalorder %s26, 1
      %p154 = por %p152, %p153
      %p156 = scmp.ne.s32.totalorder %s141, %s155
      %p157 = scmp.eq.s32.totalorder %s26, 0
      %p158 = por %p156, %p157
      %s160 = sadd.s32 %s159, 1
      %p163 = scmp.eq.s32.totalorder %s20, 1
      %p164 = scmp.ne.s32.totalorder %s159, %s161
      %p165 = scmp.eq.s32.totalorder %s20, 0
      %p166 = por %p164, %p165
      %p167 = scmp.ne.s32.totalorder %s159, %s161
      %p168 = scmp.eq.s32.totalorder %s25, 1
      %p169 = por %p167, %p168
      %p170 = scmp.ne.s32.totalorder %s161, %s162
      %p171 = scmp.eq.s32.totalorder %s25, 0
      %p172 = por %p170, %p171
      %p173 = scmp.ne.s32.totalorder %s161, %s162
      %p174 = scmp.eq.s32.totalorder %s26, 1
      %p175 = por %p173, %p174
      %p177 = scmp.ne.s32.totalorder %s162, %s176
      %p178 = scmp.eq.s32.totalorder %s26, 0
      %p179 = por %p177, %p178
      %s180 = ssub.s32 %s20, %s27
      %p181 = scmp.eq.s32.totalorder %s180, 0
      %s183 = sadd.s32 %s182, 1
      %s184 = scalar_select %p181, %s182, %s183
      %p187 = pneg %p181
      %p188 = scmp.eq.s32.totalorder %s20, 1
      %p189 = por %p187, %p188
      %p190 = scmp.ne.s32.totalorder %s182, %s185
      %p191 = scmp.eq.s32.totalorder %s20, 0
      %p192 = por %p190, %p191
      %p193 = scmp.ne.s32.totalorder %s182, %s185
      %p194 = scmp.eq.s32.totalorder %s25, 1
      %p195 = por %p193, %p194
      %p196 = scmp.ne.s32.totalorder %s185, %s186
      %p197 = scmp.eq.s32.totalorder %s25, 0
      %p198 = por %p196, %p197
      %p199 = scmp.ne.s32.totalorder %s185, %s186
      %p200 = scmp.eq.s32.totalorder %s26, 1
      %p201 = por %p199, %p200
      %p203 = scmp.ne.s32.totalorder %s186, %s202
      %p204 = scmp.eq.s32.totalorder %s26, 0
      %p205 = por %p203, %p204
      %s206 = ssub.s32 %s20, %s27
      %p207 = scmp.eq.s32.totalorder %s206, 0
      %s209 = sadd.s32 %s208, 1
      %s210 = scalar_select %p207, %s208, %s209
      %p213 = pneg %p207
      %p214 = scmp.eq.s32.totalorder %s20, 1
      %p215 = por %p213, %p214
      %p216 = scmp.ne.s32.totalorder %s208, %s211
      %p217 = scmp.eq.s32.totalorder %s20, 0
      %p218 = por %p216, %p217
      %p219 = scmp.ne.s32.totalorder %s208, %s211
      %p220 = scmp.eq.s32.totalorder %s25, 1
      %p221 = por %p219, %p220
      %p222 = scmp.ne.s32.totalorder %s211, %s212
      %p223 = scmp.eq.s32.totalorder %s25, 0
      %p224 = por %p222, %p223
      %p225 = scmp.ne.s32.totalorder %s211, %s212
      %p226 = scmp.eq.s32.totalorder %s26, 1
      %p227 = por %p225, %p226
      %p229 = scmp.ne.s32.totalorder %s212, %s228
      %p230 = scmp.eq.s32.totalorder %s26, 0
      %p231 = por %p229, %p230
      %p232 = scmp.le.s32.totalorder 1, %s20
      %p233 = scmp.lt.s32.totalorder %s20, 3
      %p234 = pnand %p232, %p233
      %p235 = pneg %p234
      // Predicated region
      $region9: #{classify_forward.1} parent=5 // pred_check
        _
      $region10: #{classify_forward.1} parent=5 // pred_check_branch
        %237 = sbr.rel (%p234) target = $region12
      $region11: #{classify_forward.1} parent=5 // pred_region
        %s238 = ssub.s32 %s20, 1
        // Predicated region
        $region13: #{classify_forward.1} parent=11 // pred_check
          %p239 = pneg %p67
        $region14: #{classify_forward.1} parent=11 // pred_check_branch
          %241 = sbr.rel (%p239) target = $region16
        $region15: #{classify_forward.1} parent=11 // pred_region
          %s243 = ssub.s32 7680, 7680
          %244 = vsyncadd [#allocation5], %s243
          %s245 = sshll.u32 [#allocation4], 4
          %s246 = int_to_ptr.vmem [resolvable:$true] %s245
          %251 = dma.hbm_to_vmem [thread:$0]  %s1, 7680, %s246, [#allocation5], 192, 192, 12
        $region16: #{classify_forward.1} parent=11 // pred_fallthru
          _
        // Predicated region
        $region17: #{classify_forward.1} parent=11 // pred_check
          %p252 = pneg %p88
        $region18: #{classify_forward.1} parent=11 // pred_check_branch
          %254 = sbr.rel (%p252) target = $region20
        $region19: #{classify_forward.1} parent=11 // pred_region
          _
        $region20: #{classify_forward.1} parent=11 // pred_fallthru
          _
        // Predicated region
        $region21: #{classify_forward.1} parent=11 // pred_check
          %p255 = pneg %p109
        $region22: #{classify_forward.1} parent=11 // pred_check_branch
          %257 = sbr.rel (%p255) target = $region24
        $region23: #{classify_forward.1} parent=11 // pred_region
          %s259 = ssub.s32 9216, 9216
          %260 = vsyncadd [#allocation5], %s259
          %s261 = sshll.u32 [#allocation6], 4
          %s262 = int_to_ptr.vmem [resolvable:$true] %s261
          %267 = dma.hbm_to_vmem [thread:$0]  %s3, 9216, %s262, [#allocation5], 192, 192, 12
        $region24: #{classify_forward.1} parent=11 // pred_fallthru
          _
        // Predicated region
        $region25: #{classify_forward.1} parent=11 // pred_check
          %p268 = pneg %p130
        $region26: #{classify_forward.1} parent=11 // pred_check_branch
          %270 = sbr.rel (%p268) target = $region28
        $region27: #{classify_forward.1} parent=11 // pred_region
          _
        $region28: #{classify_forward.1} parent=11 // pred_fallthru
          _
        // Predicated region
        $region29: #{classify_forward.1} parent=11 // pred_check
          %p271 = pneg %p151
        $region30: #{classify_forward.1} parent=11 // pred_check_branch
          %273 = sbr.rel (%p271) target = $region32
        $region31: #{classify_forward.1} parent=11 // pred_region
          %s275 = ssub.s32 3072, 3072
          %276 = vsyncadd [#allocation8], %s275
          %s277 = sshll.u32 [#allocation7], 4
          %s278 = int_to_ptr.vmem [resolvable:$true] %s277
          %283 = dma.hbm_to_vmem [thread:$0]  %s5, 3072, %s278, [#allocation8], 64, 64, 4
        $region32: #{classify_forward.1} parent=11 // pred_fallthru
          _
        // Predicated region
        $region33: #{classify_forward.1} parent=11 // pred_check
          %p284 = pneg %p172
        $region34: #{classify_forward.1} parent=11 // pred_check_branch
          %286 = sbr.rel (%p284) target = $region36
        $region35: #{classify_forward.1} parent=11 // pred_region
          _
        $region36: #{classify_forward.1} parent=11 // pred_fallthru
          _
      $region12: #{classify_forward.1} parent=5 // pred_fallthru
        _
      %p287 = scmp.lt.s32.totalorder %s20, 2
      // Predicated region
      $region37: #{classify_forward.1} parent=5 // pred_check
        %p288 = pneg %p287
      $region38: #{classify_forward.1} parent=5 // pred_check_branch
        %290 = sbr.rel (%p288) target = $region40
      $region39: #{classify_forward.1} parent=5 // pred_region
        // Predicated region
        $region41: #{classify_forward.1} parent=39 // pred_check
          %p291 = pneg %p40
        $region42: #{classify_forward.1} parent=39 // pred_check_branch
          %293 = sbr.rel (%p291) target = $region44
        $region43: #{classify_forward.1} parent=39 // pred_region
          %s294 = sand.u32 %s30, 1
          %s295 = scalar_lea.sflag [#allocation3], %s294
          %s296 = sand.u32 %s30, 1
          %s297 = smul.addr %s296, 24
          %s298 = scalar_lea.vmem [#allocation2], %s297
          %s300 = ssub.s32 384, 384
          %301 = vsyncadd %s295, %s300
          %s302 = smul.addr %s20, 3
          %s303 = smul.addr %s302, 128
          %s304 = scalar_lea.hbm %s0, %s303
          %s306 = sshll.u32 %s298, 4
          %s307 = int_to_ptr.vmem [resolvable:$true] %s306
          %309 = dma.hbm_to_vmem [thread:$0]  %s304, 384, %s307, %s295
        $region44: #{classify_forward.1} parent=39 // pred_fallthru
          _
      $region40: #{classify_forward.1} parent=5 // pred_fallthru
        _
      %p310 = scmp.le.s32.totalorder 1, %s20
      %p311 = scmp.lt.s32.totalorder %s20, 3
      %p312 = pnand %p310, %p311
      %p313 = pneg %p312
      // Predicated region
      $region45: #{classify_forward.1} parent=5 // pred_check
        _
      $region46: #{classify_forward.1} parent=5 // pred_check_branch
        %315 = sbr.rel (%p312) target = $region48
      $region47: #{classify_forward.1} parent=5 // pred_region
        %s316 = ssub.s32 %s20, 1
        %s317 = sand.u32 %s33, 1
        %s318 = scalar_lea.sflag [#allocation3], %s317
        %s319 = sand.u32 %s33, 1
        %s320 = smul.addr %s319, 24
        %s321 = scalar_lea.vmem [#allocation2], %s320
        // Predicated region
        $region49: #{classify_forward.1} parent=47 // pred_check
          %p322 = pneg %p46
        $region50: #{classify_forward.1} parent=47 // pred_check_branch
          %324 = sbr.rel (%p322) target = $region52
        $region51: #{classify_forward.1} parent=47 // pred_region
          %325 = dma.done %s318, 384
        $region52: #{classify_forward.1} parent=47 // pred_fallthru
          _
        // Predicated region
        $region53: #{classify_forward.1} parent=47 // pred_check
          %p326 = pneg %p67
        $region54: #{classify_forward.1} parent=47 // pred_check_branch
          %328 = sbr.rel (%p326) target = $region56
        $region55: #{classify_forward.1} parent=47 // pred_region
          %329 = dma.done [#allocation5], 7680
        $region56: #{classify_forward.1} parent=47 // pred_fallthru
          _
        // Predicated region
        $region57: #{classify_forward.1} parent=47 // pred_check
          %p330 = pneg %p109
        $region58: #{classify_forward.1} parent=47 // pred_check_branch
          %332 = sbr.rel (%p330) target = $region60
        $region59: #{classify_forward.1} parent=47 // pred_region
          %333 = dma.done [#allocation5], 9216
        $region60: #{classify_forward.1} parent=47 // pred_fallthru
          _
        // Predicated region
        $region61: #{classify_forward.1} parent=47 // pred_check
          %p334 = pneg %p151
        $region62: #{classify_forward.1} parent=47 // pred_check_branch
          %336 = sbr.rel (%p334) target = $region64
        $region63: #{classify_forward.1} parent=47 // pred_region
          %337 = dma.done [#allocation8], 3072
        $region64: #{classify_forward.1} parent=47 // pred_fallthru
          _
        %s338 = sand.u32 %s33, 1
        %s339 = scalar_lea.sflag [#allocation3], %s338
        %s340 = sand.u32 %s33, 1
        %s341 = smul.addr %s340, 24
        %s342 = scalar_lea.vmem [#allocation2], %s341
        %p343 = pneg %p46
        %p344 = pneg %p43
        %p345 = pneg %p67
        %p346 = pneg %p64
        %p347 = pneg %p88
        %p348 = pneg %p85
        %p349 = pneg %p109
        %p350 = pneg %p106
        %p351 = pneg %p130
        %p352 = pneg %p127
        %p353 = pneg %p151
        %p354 = pneg %p148
        %p355 = pneg %p172
        %p356 = pneg %p169
        %p357 = pneg %p198
        %p358 = pneg %p195
        %p359 = scmp.lt.s32.totalorder %s25, 1
        %s360 = scalar_select %p359, %s25, 1
        %s361 = smul.addr %s360, 8
        %s362 = scalar_lea.vmem %s7, %s361
        %p363 = pneg %p224
        %p364 = pneg %p221
        %p365 = scmp.lt.s32.totalorder %s25, 1
        %s366 = scalar_select %p365, %s25, 1
        %s367 = smul.addr %s366, 8
        %s368 = scalar_lea.vmem %s8, %s367
        %p369 = scmp.lt.s32.totalorder %s25, 1
        %s370 = scalar_select %p369, %s25, 1
        %s371 = smul.addr %s370, 8
        %s372 = scalar_lea.vmem %s7, %s371
        %p373 = scmp.lt.s32.totalorder %s25, 1
        %s374 = scalar_select %p373, %s25, 1
        %s375 = smul.addr %s374, 8
        %s376 = scalar_lea.vmem %s8, %s375
        %v378 = vld [vmem:[%s321] sm:$0xff]
        %v379 = vld [vmem:[%s321 + $0x8] sm:$0xff]
        %v380 = vld [vmem:[%s321 + $0x10] sm:$0xff]
        %v381 = vpack.c.bf16 %v378, %v378
        %v382 = vpack.c.bf16 %v379, %v379
        %v383 = vpack.c.bf16 %v380, %v380
        %v384 = vld [vmem:[#allocation4] sm:$0xff]
        %v385 = vld [vmem:[#allocation4 + $0x8] sm:$0xf]
        %v386 = vld [vmem:[#allocation4 + $0xc] sm:$0xff]
        %v387 = vld [vmem:[#allocation4 + $0x14] sm:$0xf]
        %v388 = vld [vmem:[#allocation4 + $0x18] sm:$0xff]
        %v389 = vld [vmem:[#allocation4 + $0x20] sm:$0xf]
        %v390 = vld [vmem:[#allocation4 + $0x24] sm:$0xff]
        %v391 = vld [vmem:[#allocation4 + $0x2c] sm:$0xf]
        %v392 = vld [vmem:[#allocation4 + $0x30] sm:$0xff]
        %v393 = vld [vmem:[#allocation4 + $0x38] sm:$0xf]
        %v394 = vld [vmem:[#allocation4 + $0x3c] sm:$0xff]
        %v395 = vld [vmem:[#allocation4 + $0x44] sm:$0xf]
        %v396 = vld [vmem:[#allocation4 + $0x48] sm:$0xff]
        %v397 = vld [vmem:[#allocation4 + $0x50] sm:$0xf]
        %v398 = vld [vmem:[#allocation4 + $0x54] sm:$0xff]
        %v399 = vld [vmem:[#allocation4 + $0x5c] sm:$0xf]
        %v400 = vld [vmem:[#allocation4 + $0x60] sm:$0xff]
        %v401 = vld [vmem:[#allocation4 + $0x68] sm:$0xf]
        %v402 = vld [vmem:[#allocation4 + $0x6c] sm:$0xff]
        %v403 = vld [vmem:[#allocation4 + $0x74] sm:$0xf]
        %v404 = vld [vmem:[#allocation4 + $0x78] sm:$0xff]
        %v405 = vld [vmem:[#allocation4 + $0x80] sm:$0xf]
        %v406 = vld [vmem:[#allocation4 + $0x84] sm:$0xff]
        %v407 = vld [vmem:[#allocation4 + $0x8c] sm:$0xf]
        %v408 = vld [vmem:[#allocation4 + $0x90] sm:$0xff]
        %v409 = vld [vmem:[#allocation4 + $0x98] sm:$0xf]
        %v410 = vld [vmem:[#allocation4 + $0x9c] sm:$0xff]
        %v411 = vld [vmem:[#allocation4 + $0xa4] sm:$0xf]
        %v412 = vld [vmem:[#allocation4 + $0xa8] sm:$0xff]
        %v413 = vld [vmem:[#allocation4 + $0xb0] sm:$0xf]
        %v414 = vld [vmem:[#allocation4 + $0xb4] sm:$0xff]
        %v415 = vld [vmem:[#allocation4 + $0xbc] sm:$0xf]
        %v416 = vld [vmem:[#allocation4 + $0xc0] sm:$0xff]
        %v417 = vld [vmem:[#allocation4 + $0xc8] sm:$0xf]
        %v418 = vld [vmem:[#allocation4 + $0xcc] sm:$0xff]
        %v419 = vld [vmem:[#allocation4 + $0xd4] sm:$0xf]
        %v420 = vld [vmem:[#allocation4 + $0xd8] sm:$0xff]
        %v421 = vld [vmem:[#allocation4 + $0xe0] sm:$0xf]
        %v422 = vld [vmem:[#allocation4 + $0xe4] sm:$0xff]
        %v423 = vld [vmem:[#allocation4 + $0xec] sm:$0xf]
        %v424 = vld [vmem:[#allocation4 + $0xf0] sm:$0xff]
        %v425 = vld [vmem:[#allocation4 + $0xf8] sm:$0xf]
        %v426 = vld [vmem:[#allocation4 + $0xfc] sm:$0xff]
        %v427 = vld [vmem:[#allocation4 + $0x104] sm:$0xf]
        %v428 = vld [vmem:[#allocation4 + $0x108] sm:$0xff]
        %v429 = vld [vmem:[#allocation4 + $0x110] sm:$0xf]
        %v430 = vld [vmem:[#allocation4 + $0x114] sm:$0xff]
        %v431 = vld [vmem:[#allocation4 + $0x11c] sm:$0xf]
        %v432 = vld [vmem:[#allocation4 + $0x120] sm:$0xff]
        %v433 = vld [vmem:[#allocation4 + $0x128] sm:$0xf]
        %v434 = vld [vmem:[#allocation4 + $0x12c] sm:$0xff]
        %v435 = vld [vmem:[#allocation4 + $0x134] sm:$0xf]
        %v436 = vld [vmem:[#allocation4 + $0x138] sm:$0xff]
        %v437 = vld [vmem:[#allocation4 + $0x140] sm:$0xf]
        %v438 = vld [vmem:[#allocation4 + $0x144] sm:$0xff]
        %v439 = vld [vmem:[#allocation4 + $0x14c] sm:$0xf]
        %v440 = vld [vmem:[#allocation4 + $0x150] sm:$0xff]
        %v441 = vld [vmem:[#allocation4 + $0x158] sm:$0xf]
        %v442 = vld [vmem:[#allocation4 + $0x15c] sm:$0xff]
        %v443 = vld [vmem:[#allocation4 + $0x164] sm:$0xf]
        %v444 = vld [vmem:[#allocation4 + $0x168] sm:$0xff]
        %v445 = vld [vmem:[#allocation4 + $0x170] sm:$0xf]
        %v446 = vld [vmem:[#allocation4 + $0x174] sm:$0xff]
        %v447 = vld [vmem:[#allocation4 + $0x17c] sm:$0xf]
        %v448 = vld [vmem:[#allocation4 + $0x180] sm:$0xff]
        %v449 = vld [vmem:[#allocation4 + $0x188] sm:$0xf]
        %v450 = vld [vmem:[#allocation4 + $0x18c] sm:$0xff]
        %v451 = vld [vmem:[#allocation4 + $0x194] sm:$0xf]
        %v452 = vld [vmem:[#allocation4 + $0x198] sm:$0xff]
        %v453 = vld [vmem:[#allocation4 + $0x1a0] sm:$0xf]
        %v454 = vld [vmem:[#allocation4 + $0x1a4] sm:$0xff]
        %v455 = vld [vmem:[#allocation4 + $0x1ac] sm:$0xf]
        %v456 = vld [vmem:[#allocation4 + $0x1b0] sm:$0xff]
        %v457 = vld [vmem:[#allocation4 + $0x1b8] sm:$0xf]
        %v458 = vld [vmem:[#allocation4 + $0x1bc] sm:$0xff]
        %v459 = vld [vmem:[#allocation4 + $0x1c4] sm:$0xf]
        %v460 = vld [vmem:[#allocation4 + $0x1c8] sm:$0xff]
        %v461 = vld [vmem:[#allocation4 + $0x1d0] sm:$0xf]
        %v462 = vld [vmem:[#allocation4 + $0x1d4] sm:$0x33]
        %v463 = vld [vmem:[#allocation4 + $0x1dc] sm:$0x3]
        %v464 = vld [vmem:[%s2] sm:$0x7]
        %v466 = vlaneseq
        %v467 = vshrl.u32 %v466, 7
        %v468 = vsub.s32 0, %v467
        %v469 = vrot.slane %v464, %v468
        %v470 = vlaneseq
        %v471 = vshrl.u32 %v470, 7
        %v472 = vsub.s32 1, %v471
        %v473 = vrot.slane %v464, %v472
        %v474 = vlaneseq
        %v475 = vshrl.u32 %v474, 7
        %v476 = vsub.s32 2, %v475
        %v477 = vrot.slane %v464, %v476
        %v561 = vunpack.c.l.b16 %v384
        %v562 = vunpack.c.h.b16 %v384
        %v563 = vunpack.c.l.b16 %v385
        %v564 = vunpack.c.l.b16 %v386
        %v565 = vunpack.c.h.b16 %v386
        %v566 = vunpack.c.l.b16 %v387
        %v567 = vunpack.c.l.b16 %v388
        %v568 = vunpack.c.h.b16 %v388
        %v569 = vunpack.c.l.b16 %v389
        %v570 = vunpack.c.l.b16 %v390
        %v571 = vunpack.c.h.b16 %v390
        %v572 = vunpack.c.l.b16 %v391
        %v573 = vunpack.c.l.b16 %v392
        %v574 = vunpack.c.h.b16 %v392
        %v575 = vunpack.c.l.b16 %v393
        %v576 = vunpack.c.l.b16 %v394
        %v577 = vunpack.c.h.b16 %v394
        %v578 = vunpack.c.l.b16 %v395
        %v579 = vunpack.c.l.b16 %v396
        %v580 = vunpack.c.h.b16 %v396
        %v581 = vunpack.c.l.b16 %v397
        %v582 = vunpack.c.l.b16 %v398
        %v583 = vunpack.c.h.b16 %v398
        %v584 = vunpack.c.l.b16 %v399
        %v585 = vunpack.c.l.b16 %v400
        %v586 = vunpack.c.h.b16 %v400
        %v587 = vunpack.c.l.b16 %v401
        %v588 = vunpack.c.l.b16 %v402
        %v589 = vunpack.c.h.b16 %v402
        %v590 = vunpack.c.l.b16 %v403
        %v591 = vunpack.c.l.b16 %v404
        %v592 = vunpack.c.h.b16 %v404
        %v593 = vunpack.c.l.b16 %v405
        %v594 = vunpack.c.l.b16 %v406
        %v595 = vunpack.c.h.b16 %v406
        %v596 = vunpack.c.l.b16 %v407
        %v597 = vunpack.c.l.b16 %v408
        %v598 = vunpack.c.h.b16 %v408
        %v599 = vunpack.c.l.b16 %v409
        %v600 = vunpack.c.l.b16 %v410
        %v601 = vunpack.c.h.b16 %v410
        %v602 = vunpack.c.l.b16 %v411
        %v603 = vunpack.c.l.b16 %v412
        %v604 = vunpack.c.h.b16 %v412
        %v605 = vunpack.c.l.b16 %v413
        %v606 = vunpack.c.l.b16 %v414
        %v607 = vunpack.c.h.b16 %v414
        %v608 = vunpack.c.l.b16 %v415
        %v609 = vunpack.c.l.b16 %v416
        %v610 = vunpack.c.h.b16 %v416
        %v611 = vunpack.c.l.b16 %v417
        %v612 = vunpack.c.l.b16 %v418
        %v613 = vunpack.c.h.b16 %v418
        %v614 = vunpack.c.l.b16 %v419
        %v615 = vunpack.c.l.b16 %v420
        %v616 = vunpack.c.h.b16 %v420
        %v617 = vunpack.c.l.b16 %v421
        %v618 = vunpack.c.l.b16 %v422
        %v619 = vunpack.c.h.b16 %v422
        %v620 = vunpack.c.l.b16 %v423
        %v621 = vunpack.c.l.b16 %v424
        %v622 = vunpack.c.h.b16 %v424
        %v623 = vunpack.c.l.b16 %v425
        %v624 = vunpack.c.l.b16 %v426
        %v625 = vunpack.c.h.b16 %v426
        %v626 = vunpack.c.l.b16 %v427
        %v627 = vunpack.c.l.b16 %v428
        %v628 = vunpack.c.h.b16 %v428
        %v629 = vunpack.c.l.b16 %v429
        %v630 = vunpack.c.l.b16 %v430
        %v631 = vunpack.c.h.b16 %v430
        %v632 = vunpack.c.l.b16 %v431
        %v633 = vunpack.c.l.b16 %v432
        %v634 = vunpack.c.h.b16 %v432
        %v635 = vunpack.c.l.b16 %v433
        %v636 = vunpack.c.l.b16 %v434
        %v637 = vunpack.c.h.b16 %v434
        %v638 = vunpack.c.l.b16 %v435
        %v639 = vunpack.c.l.b16 %v436
        %v640 = vunpack.c.h.b16 %v436
        %v641 = vunpack.c.l.b16 %v437
        %v642 = vunpack.c.l.b16 %v438
        %v643 = vunpack.c.h.b16 %v438
        %v644 = vunpack.c.l.b16 %v439
        %v645 = vunpack.c.l.b16 %v440
        %v646 = vunpack.c.h.b16 %v440
        %v647 = vunpack.c.l.b16 %v441
        %v648 = vunpack.c.l.b16 %v442
        %v649 = vunpack.c.h.b16 %v442
        %v650 = vunpack.c.l.b16 %v443
        %v651 = vunpack.c.l.b16 %v444
        %v652 = vunpack.c.h.b16 %v444
        %v653 = vunpack.c.l.b16 %v445
        %v654 = vunpack.c.l.b16 %v446
        %v655 = vunpack.c.h.b16 %v446
        %v656 = vunpack.c.l.b16 %v447
        %v657 = vunpack.c.l.b16 %v448
        %v658 = vunpack.c.h.b16 %v448
        %v659 = vunpack.c.l.b16 %v449
        %v660 = vunpack.c.l.b16 %v450
        %v661 = vunpack.c.h.b16 %v450
        %v662 = vunpack.c.l.b16 %v451
        %v663 = vunpack.c.l.b16 %v452
        %v664 = vunpack.c.h.b16 %v452
        %v665 = vunpack.c.l.b16 %v453
        %v666 = vunpack.c.l.b16 %v454
        %v667 = vunpack.c.h.b16 %v454
        %v668 = vunpack.c.l.b16 %v455
        %v669 = vunpack.c.l.b16 %v456
        %v670 = vunpack.c.h.b16 %v456
        %v671 = vunpack.c.l.b16 %v457
        %v672 = vunpack.c.l.b16 %v458
        %v673 = vunpack.c.h.b16 %v458
        %v674 = vunpack.c.l.b16 %v459
        %v675 = vunpack.c.l.b16 %v460
        %v676 = vunpack.c.h.b16 %v460
        %v677 = vunpack.c.l.b16 %v461
        %v678 = vunpack.c.l.b16 %v462
        %v679 = vunpack.c.h.b16 %v462
        %v680 = vunpack.c.l.b16 %v463
        %v681 = vpack.c.b16 %v564, %v561
        %v682 = vpack.c.b16 %v565, %v562
        %v683 = vpack.c.b16 %v566, %v563
        %v684 = vpack.c.b16 %v570, %v567
        %v685 = vpack.c.b16 %v571, %v568
        %v686 = vpack.c.b16 %v572, %v569
        %v687 = vpack.c.b16 %v576, %v573
        %v688 = vpack.c.b16 %v577, %v574
        %v689 = vpack.c.b16 %v578, %v575
        %v690 = vpack.c.b16 %v582, %v579
        %v691 = vpack.c.b16 %v583, %v580
        %v692 = vpack.c.b16 %v584, %v581
        %v693 = vpack.c.b16 %v588, %v585
        %v694 = vpack.c.b16 %v589, %v586
        %v695 = vpack.c.b16 %v590, %v587
        %v696 = vpack.c.b16 %v594, %v591
        %v697 = vpack.c.b16 %v595, %v592
        %v698 = vpack.c.b16 %v596, %v593
        %v699 = vpack.c.b16 %v600, %v597
        %v700 = vpack.c.b16 %v601, %v598
        %v701 = vpack.c.b16 %v602, %v599
        %v702 = vpack.c.b16 %v606, %v603
        %v703 = vpack.c.b16 %v607, %v604
        %v704 = vpack.c.b16 %v608, %v605
        %v705 = vpack.c.b16 %v612, %v609
        %v706 = vpack.c.b16 %v613, %v610
        %v707 = vpack.c.b16 %v614, %v611
        %v708 = vpack.c.b16 %v618, %v615
        %v709 = vpack.c.b16 %v619, %v616
        %v710 = vpack.c.b16 %v620, %v617
        %v711 = vpack.c.b16 %v624, %v621
        %v712 = vpack.c.b16 %v625, %v622
        %v713 = vpack.c.b16 %v626, %v623
        %v714 = vpack.c.b16 %v630, %v627
        %v715 = vpack.c.b16 %v631, %v628
        %v716 = vpack.c.b16 %v632, %v629
        %v717 = vpack.c.b16 %v636, %v633
        %v718 = vpack.c.b16 %v637, %v634
        %v719 = vpack.c.b16 %v638, %v635
        %v720 = vpack.c.b16 %v642, %v639
        %v721 = vpack.c.b16 %v643, %v640
        %v722 = vpack.c.b16 %v644, %v641
        %v723 = vpack.c.b16 %v648, %v645
        %v724 = vpack.c.b16 %v649, %v646
        %v725 = vpack.c.b16 %v650, %v647
        %v726 = vpack.c.b16 %v654, %v651
        %v727 = vpack.c.b16 %v655, %v652
        %v728 = vpack.c.b16 %v656, %v653
        %v729 = vpack.c.b16 %v660, %v657
        %v730 = vpack.c.b16 %v661, %v658
        %v731 = vpack.c.b16 %v662, %v659
        %v732 = vpack.c.b16 %v666, %v663
        %v733 = vpack.c.b16 %v667, %v664
        %v734 = vpack.c.b16 %v668, %v665
        %v735 = vpack.c.b16 %v672, %v669
        %v736 = vpack.c.b16 %v673, %v670
        %v737 = vpack.c.b16 %v674, %v671
        %v738 = vpack.c.b16 %v678, %v675
        %v739 = vpack.c.b16 %v679, %v676
        %v740 = vpack.c.b16 %v680, %v677
        %vm798 = vcmask 490496
        %v800 = vsel %vm798, %v383, 0
        %vm802 = vcmask 1045504
        %v804 = vsel %vm802, %v738, 0
        %v807 = vsel %vm802, %v739, 0
        %v810 = vsel %vm802, %v740, 0
        %812 = vmatprep.subr.bf16.mxu0 %v682
        %813 = vmatpush1.bf16.msra.mxu0 %v681
        %814 = vmatprep.subr.bf16.mxu0 %v685
        %815 = vmatpush1.bf16.msra.mxu0 %v684
        %816 = vmatprep.subr.bf16.mxu0 %v688
        %817 = vmatpush1.bf16.msra.mxu0 %v687
        %818 = vmatprep.subr.bf16.mxu0 %v691
        %819 = vmatpush1.bf16.msra.mxu0 %v690
        %820 = vmatprep.subr.bf16.mxu0 %v694
        %821 = vmatpush1.bf16.msra.mxu0 %v693
        %822 = vmatprep.subr.bf16.mxu0 %v697
        %823 = vmatpush1.bf16.msra.mxu0 %v696
        %824 = vmatprep.subr.bf16.mxu0 %v700
        %825 = vmatpush1.bf16.msra.mxu0 %v699
        %826 = vmatprep.subr.bf16.mxu0 %v703
        %827 = vmatpush1.bf16.msra.mxu0 %v702
        %828 = vmatprep.subr.bf16.mxu0 %v706
        %829 = vmatpush1.bf16.msra.mxu0 %v705
        %830 = vmatprep.subr.bf16.mxu0 %v709
        %831 = vmatpush1.bf16.msra.mxu0 %v708
        %832 = vmatprep.subr.bf16.mxu0 %v712
        %833 = vmatpush1.bf16.msra.mxu0 %v711
        %834 = vmatprep.subr.bf16.mxu0 %v715
        %835 = vmatpush1.bf16.msra.mxu0 %v714
        %836 = vmatprep.subr.bf16.mxu0 %v718
        %837 = vmatpush1.bf16.msra.mxu0 %v717
        %838 = vmatprep.subr.bf16.mxu0 %v721
        %839 = vmatpush1.bf16.msra.mxu0 %v720
        %840 = vmatprep.subr.bf16.mxu0 %v724
        %841 = vmatpush1.bf16.msra.mxu0 %v723
        %842 = vmatprep.subr.bf16.mxu0 %v727
        %843 = vmatpush1.bf16.msra.mxu0 %v726
        %844 = vmatprep.mubr.bf16.mxu0 %v382
        %845 = vmatmul.mubr.bf16.gmra.mrb[0].mxu0 %v381
        %v846 = vpop.f32.mrb[0].mxu0
        %v847 = vadd.f32 %v469, %v846
        %v848 = vpop.f32.mrb[0].mxu0
        %v849 = vadd.f32 %v473, %v848
        %v850 = vpop.f32.mrb[0].mxu0
        %v851 = vpop.f32.mrb[0].mxu0
        %852 = vdwg.mxu0
        %853 = vmatprep.subr.bf16.mxu0 %v730
        %854 = vmatpush1.bf16.msra.mxu0 %v729
        %855 = vmatprep.subr.bf16.mxu0 %v733
        %856 = vmatpush1.bf16.msra.mxu0 %v732
        %857 = vmatprep.subr.bf16.mxu0 %v736
        %858 = vmatpush1.bf16.msra.mxu0 %v735
        %859 = vmatprep.subr.bf16.mxu0 %v807
        %860 = vmatpush1.bf16.msra.mxu0 %v804
        %861 = vmatprep.subr.bf16.mxu0 0
        %862 = vmatpush1.bf16.msra.mxu0 0
        %863 = vmatprep.subr.bf16.mxu0 0
        %864 = vmatpush1.bf16.msra.mxu0 0
        %865 = vmatprep.subr.bf16.mxu0 0
        %866 = vmatpush1.bf16.msra.mxu0 0
        %867 = vmatprep.subr.bf16.mxu0 0
        %868 = vmatpush1.bf16.msra.mxu0 0
        %869 = vmatprep.subr.bf16.mxu0 0
        %870 = vmatpush1.bf16.msra.mxu0 0
        %871 = vmatprep.subr.bf16.mxu0 0
        %872 = vmatpush1.bf16.msra.mxu0 0
        %873 = vmatprep.subr.bf16.mxu0 0
        %874 = vmatpush1.bf16.msra.mxu0 0
        %875 = vmatprep.subr.bf16.mxu0 0
        %876 = vmatpush1.bf16.msra.mxu0 0
        %877 = vmatprep.subr.bf16.mxu0 0
        %878 = vmatpush1.bf16.msra.mxu0 0
        %879 = vmatprep.subr.bf16.mxu0 0
        %880 = vmatpush1.bf16.msra.mxu0 0
        %881 = vmatprep.subr.bf16.mxu0 0
        %882 = vmatpush1.bf16.msra.mxu0 0
        %883 = vmatprep.subr.bf16.mxu0 0
        %884 = vmatpush1.bf16.msra.mxu0 0
        %885 = vmatprep.mubr.bf16.mxu0 0
        %886 = vmatmul.mubr.bf16.gmra.mrb[0].mxu0 %v800
        %v887 = vpop.f32.mrb[0].mxu0
        %v888 = vadd.f32 %v847, %v887
        %v889 = vpop.f32.mrb[0].mxu0
        %v890 = vadd.f32 %v849, %v889
        %v891 = vpop.f32.mrb[0].mxu0
        %v892 = vpop.f32.mrb[0].mxu0
        %893 = vdwg.mxu0
        %894 = vmatprep.subr.bf16.mxu0 0
        %895 = vmatpush1.bf16.msra.mxu0 %v683
        %896 = vmatprep.subr.bf16.mxu0 0
        %897 = vmatpush1.bf16.msra.mxu0 %v686
        %898 = vmatprep.subr.bf16.mxu0 0
        %899 = vmatpush1.bf16.msra.mxu0 %v689
        %900 = vmatprep.subr.bf16.mxu0 0
        %901 = vmatpush1.bf16.msra.mxu0 %v692
        %902 = vmatprep.subr.bf16.mxu0 0
        %903 = vmatpush1.bf16.msra.mxu0 %v695
        %904 = vmatprep.subr.bf16.mxu0 0
        %905 = vmatpush1.bf16.msra.mxu0 %v698
        %906 = vmatprep.subr.bf16.mxu0 0
        %907 = vmatpush1.bf16.msra.mxu0 %v701
        %908 = vmatprep.subr.bf16.mxu0 0
        %909 = vmatpush1.bf16.msra.mxu0 %v704
        %910 = vmatprep.subr.bf16.mxu0 0
        %911 = vmatpush1.bf16.msra.mxu0 %v707
        %912 = vmatprep.subr.bf16.mxu0 0
        %913 = vmatpush1.bf16.msra.mxu0 %v710
        %914 = vmatprep.subr.bf16.mxu0 0
        %915 = vmatpush1.bf16.msra.mxu0 %v713
        %916 = vmatprep.subr.bf16.mxu0 0
        %917 = vmatpush1.bf16.msra.mxu0 %v716
        %918 = vmatprep.subr.bf16.mxu0 0
        %919 = vmatpush1.bf16.msra.mxu0 %v719
        %920 = vmatprep.subr.bf16.mxu0 0
        %921 = vmatpush1.bf16.msra.mxu0 %v722
        %922 = vmatprep.subr.bf16.mxu0 0
        %923 = vmatpush1.bf16.msra.mxu0 %v725
        %924 = vmatprep.subr.bf16.mxu0 0
        %925 = vmatpush1.bf16.msra.mxu0 %v728
        %926 = vmatprep.mubr.bf16.mxu0 %v382
        %927 = vmatmul.mubr.bf16.gmra.mrb[0].mxu0 %v381
        %v928 = vpop.f32.mrb[0].mxu0
        %v929 = vadd.f32 %v477, %v928
        %v930 = vpop.f32.mrb[0].mxu0
        %v931 = vpop.f32.mrb[0].mxu0
        %v932 = vpop.f32.mrb[0].mxu0
        %933 = vdwg.mxu0
        %934 = vmatprep.subr.bf16.mxu0 0
        %935 = vmatpush1.bf16.msra.mxu0 %v731
        %936 = vmatprep.subr.bf16.mxu0 0
        %937 = vmatpush1.bf16.msra.mxu0 %v734
        %938 = vmatprep.subr.bf16.mxu0 0
        %939 = vmatpush1.bf16.msra.mxu0 %v737
        %940 = vmatprep.subr.bf16.mxu0 0
        %941 = vmatpush1.bf16.msra.mxu0 %v810
        %942 = vmatprep.subr.bf16.mxu0 0
        %943 = vmatpush1.bf16.msra.mxu0 0
        %944 = vmatprep.subr.bf16.mxu0 0
        %945 = vmatpush1.bf16.msra.mxu0 0
        %946 = vmatprep.subr.bf16.mxu0 0
        %947 = vmatpush1.bf16.msra.mxu0 0
        %948 = vmatprep.subr.bf16.mxu0 0
        %949 = vmatpush1.bf16.msra.mxu0 0
        %950 = vmatprep.subr.bf16.mxu0 0
        %951 = vmatpush1.bf16.msra.mxu0 0
        %952 = vmatprep.subr.bf16.mxu0 0
        %953 = vmatpush1.bf16.msra.mxu0 0
        %954 = vmatprep.subr.bf16.mxu0 0
        %955 = vmatpush1.bf16.msra.mxu0 0
        %956 = vmatprep.subr.bf16.mxu0 0
        %957 = vmatpush1.bf16.msra.mxu0 0
        %958 = vmatprep.subr.bf16.mxu0 0
        %959 = vmatpush1.bf16.msra.mxu0 0
        %960 = vmatprep.subr.bf16.mxu0 0
        %961 = vmatpush1.bf16.msra.mxu0 0
        %962 = vmatprep.subr.bf16.mxu0 0
        %963 = vmatpush1.bf16.msra.mxu0 0
        %964 = vmatprep.subr.bf16.mxu0 0
        %965 = vmatpush1.bf16.msra.mxu0 0
        %966 = vmatprep.mubr.bf16.mxu0 0
        %967 = vmatmul.mubr.bf16.gmra.mrb[0].mxu0 %v800
        %v968 = vpop.f32.mrb[0].mxu0
        %v969 = vadd.f32 %v929, %v968
        %v970 = vpop.f32.mrb[0].mxu0
        %v971 = vpop.f32.mrb[0].mxu0
        %v972 = vpop.f32.mrb[0].mxu0
        %973 = vdwg.mxu0
        %v974 = vxor.u32 %v888, 2147483648
        %v975 = vxor.u32 %v890, 2147483648
        %v976 = vxor.u32 %v969, 2147483648
        %v977 = vmul.f32 %v974, 1.442695
        %v978 = vpow.pop %v977
        %v979 = vmul.f32 %v975, 1.442695
        %v980 = vpow.pop %v979
        %v981 = vmul.f32 %v976, 1.442695
        %v982 = vpow.pop %v981
        %v983 = vadd.f32 %v978, 1.0
        %v984 = vadd.f32 %v980, 1.0
        %v985 = vadd.f32 %v982, 1.0
        %v986 = vrcp.pop %v983
        %v987 = vmul.f32 1.0, %v986
        %v988 = vrcp.pop %v984
        %v989 = vmul.f32 1.0, %v988
        %v990 = vrcp.pop %v985
        %v991 = vmul.f32 1.0, %v990
        %v992 = vpack.c.bf16 %v987, %v987
        %v993 = vpack.c.bf16 %v989, %v989
        %v994 = vpack.c.bf16 %v991, %v991
        %v995 = vld [vmem:[#allocation6] sm:$0xff]
        %v996 = vld [vmem:[#allocation6 + $0x8] sm:$0xf]
        %v997 = vld [vmem:[#allocation6 + $0xc] sm:$0xff]
        %v998 = vld [vmem:[#allocation6 + $0x14] sm:$0xf]
        %v999 = vld [vmem:[#allocation6 + $0x18] sm:$0xff]
        %v1000 = vld [vmem:[#allocation6 + $0x20] sm:$0xf]
        %v1001 = vld [vmem:[#allocation6 + $0x24] sm:$0xff]
        %v1002 = vld [vmem:[#allocation6 + $0x2c] sm:$0xf]
        %v1003 = vld [vmem:[#allocation6 + $0x30] sm:$0xff]
        %v1004 = vld [vmem:[#allocation6 + $0x38] sm:$0xf]
        %v1005 = vld [vmem:[#allocation6 + $0x3c] sm:$0xff]
        %v1006 = vld [vmem:[#allocation6 + $0x44] sm:$0xf]
        %v1007 = vld [vmem:[#allocation6 + $0x48] sm:$0xff]
        %v1008 = vld [vmem:[#allocation6 + $0x50] sm:$0xf]
        %v1009 = vld [vmem:[#allocation6 + $0x54] sm:$0xff]
        %v1010 = vld [vmem:[#allocation6 + $0x5c] sm:$0xf]
        %v1011 = vld [vmem:[#allocation6 + $0x60] sm:$0xff]
        %v1012 = vld [vmem:[#allocation6 + $0x68] sm:$0xf]
        %v1013 = vld [vmem:[#allocation6 + $0x6c] sm:$0xff]
        %v1014 = vld [vmem:[#allocation6 + $0x74] sm:$0xf]
        %v1015 = vld [vmem:[#allocation6 + $0x78] sm:$0xff]
        %v1016 = vld [vmem:[#allocation6 + $0x80] sm:$0xf]
        %v1017 = vld [vmem:[#allocation6 + $0x84] sm:$0xff]
        %v1018 = vld [vmem:[#allocation6 + $0x8c] sm:$0xf]
        %v1019 = vld [vmem:[#allocation6 + $0x90] sm:$0xff]
        %v1020 = vld [vmem:[#allocation6 + $0x98] sm:$0xf]
        %v1021 = vld [vmem:[#allocation6 + $0x9c] sm:$0xff]
        %v1022 = vld [vmem:[#allocation6 + $0xa4] sm:$0xf]
        %v1023 = vld [vmem:[#allocation6 + $0xa8] sm:$0xff]
        %v1024 = vld [vmem:[#allocation6 + $0xb0] sm:$0xf]
        %v1025 = vld [vmem:[#allocation6 + $0xb4] sm:$0xff]
        %v1026 = vld [vmem:[#allocation6 + $0xbc] sm:$0xf]
        %v1027 = vld [vmem:[#allocation6 + $0xc0] sm:$0xff]
        %v1028 = vld [vmem:[#allocation6 + $0xc8] sm:$0xf]
        %v1029 = vld [vmem:[#allocation6 + $0xcc] sm:$0xff]
        %v1030 = vld [vmem:[#allocation6 + $0xd4] sm:$0xf]
        %v1031 = vld [vmem:[#allocation6 + $0xd8] sm:$0xff]
        %v1032 = vld [vmem:[#allocation6 + $0xe0] sm:$0xf]
        %v1033 = vld [vmem:[#allocation6 + $0xe4] sm:$0xff]
        %v1034 = vld [vmem:[#allocation6 + $0xec] sm:$0xf]
        %v1035 = vld [vmem:[#allocation6 + $0xf0] sm:$0xff]
        %v1036 = vld [vmem:[#allocation6 + $0xf8] sm:$0xf]
        %v1037 = vld [vmem:[#allocation6 + $0xfc] sm:$0xff]
        %v1038 = vld [vmem:[#allocation6 + $0x104] sm:$0xf]
        %v1039 = vld [vmem:[#allocation6 + $0x108] sm:$0xff]
        %v1040 = vld [vmem:[#allocation6 + $0x110] sm:$0xf]
        %v1041 = vld [vmem:[#allocation6 + $0x114] sm:$0xff]
        %v1042 = vld [vmem:[#allocation6 + $0x11c] sm:$0xf]
        %v1043 = vld [vmem:[#allocation6 + $0x120] sm:$0xff]
        %v1044 = vld [vmem:[#allocation6 + $0x128] sm:$0xf]
        %v1045 = vld [vmem:[#allocation6 + $0x12c] sm:$0xff]
        %v1046 = vld [vmem:[#allocation6 + $0x134] sm:$0xf]
        %v1047 = vld [vmem:[#allocation6 + $0x138] sm:$0xff]
        %v1048 = vld [vmem:[#allocation6 + $0x140] sm:$0xf]
        %v1049 = vld [vmem:[#allocation6 + $0x144] sm:$0xff]
        %v1050 = vld [vmem:[#allocation6 + $0x14c] sm:$0xf]
        %v1051 = vld [vmem:[#allocation6 + $0x150] sm:$0xff]
        %v1052 = vld [vmem:[#allocation6 + $0x158] sm:$0xf]
        %v1053 = vld [vmem:[#allocation6 + $0x15c] sm:$0xff]
        %v1054 = vld [vmem:[#allocation6 + $0x164] sm:$0xf]
        %v1055 = vld [vmem:[#allocation6 + $0x168] sm:$0xff]
        %v1056 = vld [vmem:[#allocation6 + $0x170] sm:$0xf]
        %v1057 = vld [vmem:[#allocation6 + $0x174] sm:$0xff]
        %v1058 = vld [vmem:[#allocation6 + $0x17c] sm:$0xf]
        %v1059 = vld [vmem:[#allocation6 + $0x180] sm:$0xff]
        %v1060 = vld [vmem:[#allocation6 + $0x188] sm:$0xf]
        %v1061 = vld [vmem:[#allocation6 + $0x18c] sm:$0xff]
        %v1062 = vld [vmem:[#allocation6 + $0x194] sm:$0xf]
        %v1063 = vld [vmem:[#allocation6 + $0x198] sm:$0xff]
        %v1064 = vld [vmem:[#allocation6 + $0x1a0] sm:$0xf]
        %v1065 = vld [vmem:[#allocation6 + $0x1a4] sm:$0xff]
        %v1066 = vld [vmem:[#allocation6 + $0x1ac] sm:$0xf]
        %v1067 = vld [vmem:[#allocation6 + $0x1b0] sm:$0xff]
        %v1068 = vld [vmem:[#allocation6 + $0x1b8] sm:$0xf]
        %v1069 = vld [vmem:[#allocation6 + $0x1bc] sm:$0xff]
        %v1070 = vld [vmem:[#allocation6 + $0x1c4] sm:$0xf]
        %v1071 = vld [vmem:[#allocation6 + $0x1c8] sm:$0xff]
        %v1072 = vld [vmem:[#allocation6 + $0x1d0] sm:$0xf]
        %v1073 = vld [vmem:[#allocation6 + $0x1d4] sm:$0xff]
        %v1074 = vld [vmem:[#allocation6 + $0x1dc] sm:$0xf]
        %v1075 = vld [vmem:[#allocation6 + $0x1e0] sm:$0xff]
        %v1076 = vld [vmem:[#allocation6 + $0x1e8] sm:$0xf]
        %v1077 = vld [vmem:[#allocation6 + $0x1ec] sm:$0xff]
        %v1078 = vld [vmem:[#allocation6 + $0x1f4] sm:$0xf]
        %v1079 = vld [vmem:[#allocation6 + $0x1f8] sm:$0xff]
        %v1080 = vld [vmem:[#allocation6 + $0x200] sm:$0xf]
        %v1081 = vld [vmem:[#allocation6 + $0x204] sm:$0xff]
        %v1082 = vld [vmem:[#allocation6 + $0x20c] sm:$0xf]
        %v1083 = vld [vmem:[#allocation6 + $0x210] sm:$0xff]
        %v1084 = vld [vmem:[#allocation6 + $0x218] sm:$0xf]
        %v1085 = vld [vmem:[#allocation6 + $0x21c] sm:$0xff]
        %v1086 = vld [vmem:[#allocation6 + $0x224] sm:$0xf]
        %v1087 = vld [vmem:[#allocation6 + $0x228] sm:$0xff]
        %v1088 = vld [vmem:[#allocation6 + $0x230] sm:$0xf]
        %v1089 = vld [vmem:[#allocation6 + $0x234] sm:$0xff]
        %v1090 = vld [vmem:[#allocation6 + $0x23c] sm:$0xf]
        %v1091 = vld [vmem:[%s4] sm:$0x7]
        %v1093 = vlaneseq
        %v1094 = vshrl.u32 %v1093, 7
        %v1095 = vsub.s32 0, %v1094
        %v1096 = vrot.slane %v1091, %v1095
        %v1097 = vlaneseq
        %v1098 = vshrl.u32 %v1097, 7
        %v1099 = vsub.s32 1, %v1098
        %v1100 = vrot.slane %v1091, %v1099
        %v1101 = vlaneseq
        %v1102 = vshrl.u32 %v1101, 7
        %v1103 = vsub.s32 2, %v1102
        %v1104 = vrot.slane %v1091, %v1103
        %v1204 = vunpack.c.l.b16 %v995
        %v1205 = vunpack.c.h.b16 %v995
        %v1206 = vunpack.c.l.b16 %v996
        %v1207 = vunpack.c.l.b16 %v997
        %v1208 = vunpack.c.h.b16 %v997
        %v1209 = vunpack.c.l.b16 %v998
        %v1210 = vunpack.c.l.b16 %v999
        %v1211 = vunpack.c.h.b16 %v999
        %v1212 = vunpack.c.l.b16 %v1000
        %v1213 = vunpack.c.l.b16 %v1001
        %v1214 = vunpack.c.h.b16 %v1001
        %v1215 = vunpack.c.l.b16 %v1002
        %v1216 = vunpack.c.l.b16 %v1003
        %v1217 = vunpack.c.h.b16 %v1003
        %v1218 = vunpack.c.l.b16 %v1004
        %v1219 = vunpack.c.l.b16 %v1005
        %v1220 = vunpack.c.h.b16 %v1005
        %v1221 = vunpack.c.l.b16 %v1006
        %v1222 = vunpack.c.l.b16 %v1007
        %v1223 = vunpack.c.h.b16 %v1007
        %v1224 = vunpack.c.l.b16 %v1008
        %v1225 = vunpack.c.l.b16 %v1009
        %v1226 = vunpack.c.h.b16 %v1009
        %v1227 = vunpack.c.l.b16 %v1010
        %v1228 = vunpack.c.l.b16 %v1011
        %v1229 = vunpack.c.h.b16 %v1011
        %v1230 = vunpack.c.l.b16 %v1012
        %v1231 = vunpack.c.l.b16 %v1013
        %v1232 = vunpack.c.h.b16 %v1013
        %v1233 = vunpack.c.l.b16 %v1014
        %v1234 = vunpack.c.l.b16 %v1015
        %v1235 = vunpack.c.h.b16 %v1015
        %v1236 = vunpack.c.l.b16 %v1016
        %v1237 = vunpack.c.l.b16 %v1017
        %v1238 = vunpack.c.h.b16 %v1017
        %v1239 = vunpack.c.l.b16 %v1018
        %v1240 = vunpack.c.l.b16 %v1019
        %v1241 = vunpack.c.h.b16 %v1019
        %v1242 = vunpack.c.l.b16 %v1020
        %v1243 = vunpack.c.l.b16 %v1021
        %v1244 = vunpack.c.h.b16 %v1021
        %v1245 = vunpack.c.l.b16 %v1022
        %v1246 = vunpack.c.l.b16 %v1023
        %v1247 = vunpack.c.h.b16 %v1023
        %v1248 = vunpack.c.l.b16 %v1024
        %v1249 = vunpack.c.l.b16 %v1025
        %v1250 = vunpack.c.h.b16 %v1025
        %v1251 = vunpack.c.l.b16 %v1026
        %v1252 = vunpack.c.l.b16 %v1027
        %v1253 = vunpack.c.h.b16 %v1027
        %v1254 = vunpack.c.l.b16 %v1028
        %v1255 = vunpack.c.l.b16 %v1029
        %v1256 = vunpack.c.h.b16 %v1029
        %v1257 = vunpack.c.l.b16 %v1030
        %v1258 = vunpack.c.l.b16 %v1031
        %v1259 = vunpack.c.h.b16 %v1031
        %v1260 = vunpack.c.l.b16 %v1032
        %v1261 = vunpack.c.l.b16 %v1033
        %v1262 = vunpack.c.h.b16 %v1033
        %v1263 = vunpack.c.l.b16 %v1034
        %v1264 = vunpack.c.l.b16 %v1035
        %v1265 = vunpack.c.h.b16 %v1035
        %v1266 = vunpack.c.l.b16 %v1036
        %v1267 = vunpack.c.l.b16 %v1037
        %v1268 = vunpack.c.h.b16 %v1037
        %v1269 = vunpack.c.l.b16 %v1038
        %v1270 = vunpack.c.l.b16 %v1039
        %v1271 = vunpack.c.h.b16 %v1039
        %v1272 = vunpack.c.l.b16 %v1040
        %v1273 = vunpack.c.l.b16 %v1041
        %v1274 = vunpack.c.h.b16 %v1041
        %v1275 = vunpack.c.l.b16 %v1042
        %v1276 = vunpack.c.l.b16 %v1043
        %v1277 = vunpack.c.h.b16 %v1043
        %v1278 = vunpack.c.l.b16 %v1044
        %v1279 = vunpack.c.l.b16 %v1045
        %v1280 = vunpack.c.h.b16 %v1045
        %v1281 = vunpack.c.l.b16 %v1046
        %v1282 = vunpack.c.l.b16 %v1047
        %v1283 = vunpack.c.h.b16 %v1047
        %v1284 = vunpack.c.l.b16 %v1048
        %v1285 = vunpack.c.l.b16 %v1049
        %v1286 = vunpack.c.h.b16 %v1049
        %v1287 = vunpack.c.l.b16 %v1050
        %v1288 = vunpack.c.l.b16 %v1051
        %v1289 = vunpack.c.h.b16 %v1051
        %v1290 = vunpack.c.l.b16 %v1052
        %v1291 = vunpack.c.l.b16 %v1053
        %v1292 = vunpack.c.h.b16 %v1053
        %v1293 = vunpack.c.l.b16 %v1054
        %v1294 = vunpack.c.l.b16 %v1055
        %v1295 = vunpack.c.h.b16 %v1055
        %v1296 = vunpack.c.l.b16 %v1056
        %v1297 = vunpack.c.l.b16 %v1057
        %v1298 = vunpack.c.h.b16 %v1057
        %v1299 = vunpack.c.l.b16 %v1058
        %v1300 = vunpack.c.l.b16 %v1059
        %v1301 = vunpack.c.h.b16 %v1059
        %v1302 = vunpack.c.l.b16 %v1060
        %v1303 = vunpack.c.l.b16 %v1061
        %v1304 = vunpack.c.h.b16 %v1061
        %v1305 = vunpack.c.l.b16 %v1062
        %v1306 = vunpack.c.l.b16 %v1063
        %v1307 = vunpack.c.h.b16 %v1063
        %v1308 = vunpack.c.l.b16 %v1064
        %v1309 = vunpack.c.l.b16 %v1065
        %v1310 = vunpack.c.h.b16 %v1065
        %v1311 = vunpack.c.l.b16 %v1066
        %v1312 = vunpack.c.l.b16 %v1067
        %v1313 = vunpack.c.h.b16 %v1067
        %v1314 = vunpack.c.l.b16 %v1068
        %v1315 = vunpack.c.l.b16 %v1069
        %v1316 = vunpack.c.h.b16 %v1069
        %v1317 = vunpack.c.l.b16 %v1070
        %v1318 = vunpack.c.l.b16 %v1071
        %v1319 = vunpack.c.h.b16 %v1071
        %v1320 = vunpack.c.l.b16 %v1072
        %v1321 = vunpack.c.l.b16 %v1073
        %v1322 = vunpack.c.h.b16 %v1073
        %v1323 = vunpack.c.l.b16 %v1074
        %v1324 = vunpack.c.l.b16 %v1075
        %v1325 = vunpack.c.h.b16 %v1075
        %v1326 = vunpack.c.l.b16 %v1076
        %v1327 = vunpack.c.l.b16 %v1077
        %v1328 = vunpack.c.h.b16 %v1077
        %v1329 = vunpack.c.l.b16 %v1078
        %v1330 = vunpack.c.l.b16 %v1079
        %v1331 = vunpack.c.h.b16 %v1079
        %v1332 = vunpack.c.l.b16 %v1080
        %v1333 = vunpack.c.l.b16 %v1081
        %v1334 = vunpack.c.h.b16 %v1081
        %v1335 = vunpack.c.l.b16 %v1082
        %v1336 = vunpack.c.l.b16 %v1083
        %v1337 = vunpack.c.h.b16 %v1083
        %v1338 = vunpack.c.l.b16 %v1084
        %v1339 = vunpack.c.l.b16 %v1085
        %v1340 = vunpack.c.h.b16 %v1085
        %v1341 = vunpack.c.l.b16 %v1086
        %v1342 = vunpack.c.l.b16 %v1087
        %v1343 = vunpack.c.h.b16 %v1087
        %v1344 = vunpack.c.l.b16 %v1088
        %v1345 = vunpack.c.l.b16 %v1089
        %v1346 = vunpack.c.h.b16 %v1089
        %v1347 = vunpack.c.l.b16 %v1090
        %v1348 = vpack.c.b16 %v1207, %v1204
        %v1349 = vpack.c.b16 %v1208, %v1205
        %v1350 = vpack.c.b16 %v1209, %v1206
        %v1351 = vpack.c.b16 %v1213, %v1210
        %v1352 = vpack.c.b16 %v1214, %v1211
        %v1353 = vpack.c.b16 %v1215, %v1212
        %v1354 = vpack.c.b16 %v1219, %v1216
        %v1355 = vpack.c.b16 %v1220, %v1217
        %v1356 = vpack.c.b16 %v1221, %v1218
        %v1357 = vpack.c.b16 %v1225, %v1222
        %v1358 = vpack.c.b16 %v1226, %v1223
        %v1359 = vpack.c.b16 %v1227, %v1224
        %v1360 = vpack.c.b16 %v1231, %v1228
        %v1361 = vpack.c.b16 %v1232, %v1229
        %v1362 = vpack.c.b16 %v1233, %v1230
        %v1363 = vpack.c.b16 %v1237, %v1234
        %v1364 = vpack.c.b16 %v1238, %v1235
        %v1365 = vpack.c.b16 %v1239, %v1236
        %v1366 = vpack.c.b16 %v1243, %v1240
        %v1367 = vpack.c.b16 %v1244, %v1241
        %v1368 = vpack.c.b16 %v1245, %v1242
        %v1369 = vpack.c.b16 %v1249, %v1246
        %v1370 = vpack.c.b16 %v1250, %v1247
        %v1371 = vpack.c.b16 %v1251, %v1248
        %v1372 = vpack.c.b16 %v1255, %v1252
        %v1373 = vpack.c.b16 %v1256, %v1253
        %v1374 = vpack.c.b16 %v1257, %v1254
        %v1375 = vpack.c.b16 %v1261, %v1258
        %v1376 = vpack.c.b16 %v1262, %v1259
        %v1377 = vpack.c.b16 %v1263, %v1260
        %v1378 = vpack.c.b16 %v1267, %v1264
        %v1379 = vpack.c.b16 %v1268, %v1265
        %v1380 = vpack.c.b16 %v1269, %v1266
        %v1381 = vpack.c.b16 %v1273, %v1270
        %v1382 = vpack.c.b16 %v1274, %v1271
        %v1383 = vpack.c.b16 %v1275, %v1272
        %v1384 = vpack.c.b16 %v1279, %v1276
        %v1385 = vpack.c.b16 %v1280, %v1277
        %v1386 = vpack.c.b16 %v1281, %v1278
        %v1387 = vpack.c.b16 %v1285, %v1282
        %v1388 = vpack.c.b16 %v1286, %v1283
        %v1389 = vpack.c.b16 %v1287, %v1284
        %v1390 = vpack.c.b16 %v1291, %v1288
        %v1391 = vpack.c.b16 %v1292, %v1289
        %v1392 = vpack.c.b16 %v1293, %v1290
        %v1393 = vpack.c.b16 %v1297, %v1294
        %v1394 = vpack.c.b16 %v1298, %v1295
        %v1395 = vpack.c.b16 %v1299, %v1296
        %v1396 = vpack.c.b16 %v1303, %v1300
        %v1397 = vpack.c.b16 %v1304, %v1301
        %v1398 = vpack.c.b16 %v1305, %v1302
        %v1399 = vpack.c.b16 %v1309, %v1306
        %v1400 = vpack.c.b16 %v1310, %v1307
        %v1401 = vpack.c.b16 %v1311, %v1308
        %v1402 = vpack.c.b16 %v1315, %v1312
        %v1403 = vpack.c.b16 %v1316, %v1313
        %v1404 = vpack.c.b16 %v1317, %v1314
        %v1405 = vpack.c.b16 %v1321, %v1318
        %v1406 = vpack.c.b16 %v1322, %v1319
        %v1407 = vpack.c.b16 %v1323, %v1320
        %v1408 = vpack.c.b16 %v1327, %v1324
        %v1409 = vpack.c.b16 %v1328, %v1325
        %v1410 = vpack.c.b16 %v1329, %v1326
        %v1411 = vpack.c.b16 %v1333, %v1330
        %v1412 = vpack.c.b16 %v1334, %v1331
        %v1413 = vpack.c.b16 %v1335, %v1332
        %v1414 = vpack.c.b16 %v1339, %v1336
        %v1415 = vpack.c.b16 %v1340, %v1337
        %v1416 = vpack.c.b16 %v1341, %v1338
        %v1417 = vpack.c.b16 %v1345, %v1342
        %v1418 = vpack.c.b16 %v1346, %v1343
        %v1419 = vpack.c.b16 %v1347, %v1344
        %1492 = vmatprep.subr.bf16.mxu0 %v1349
        %1493 = vmatpush1.bf16.msra.mxu0 %v1348
        %1494 = vmatprep.subr.bf16.mxu0 %v1352
        %1495 = vmatpush1.bf16.msra.mxu0 %v1351
        %1496 = vmatprep.subr.bf16.mxu0 %v1355
        %1497 = vmatpush1.bf16.msra.mxu0 %v1354
        %1498 = vmatprep.subr.bf16.mxu0 %v1358
        %1499 = vmatpush1.bf16.msra.mxu0 %v1357
        %1500 = vmatprep.subr.bf16.mxu0 %v1361
        %1501 = vmatpush1.bf16.msra.mxu0 %v1360
        %1502 = vmatprep.subr.bf16.mxu0 %v1364
        %1503 = vmatpush1.bf16.msra.mxu0 %v1363
        %1504 = vmatprep.subr.bf16.mxu0 %v1367
        %1505 = vmatpush1.bf16.msra.mxu0 %v1366
        %1506 = vmatprep.subr.bf16.mxu0 %v1370
        %1507 = vmatpush1.bf16.msra.mxu0 %v1369
        %1508 = vmatprep.subr.bf16.mxu0 %v1373
        %1509 = vmatpush1.bf16.msra.mxu0 %v1372
        %1510 = vmatprep.subr.bf16.mxu0 %v1376
        %1511 = vmatpush1.bf16.msra.mxu0 %v1375
        %1512 = vmatprep.subr.bf16.mxu0 %v1379
        %1513 = vmatpush1.bf16.msra.mxu0 %v1378
        %1514 = vmatprep.subr.bf16.mxu0 %v1382
        %1515 = vmatpush1.bf16.msra.mxu0 %v1381
        %1516 = vmatprep.subr.bf16.mxu0 %v1385
        %1517 = vmatpush1.bf16.msra.mxu0 %v1384
        %1518 = vmatprep.subr.bf16.mxu0 %v1388
        %1519 = vmatpush1.bf16.msra.mxu0 %v1387
        %1520 = vmatprep.subr.bf16.mxu0 %v1391
        %1521 = vmatpush1.bf16.msra.mxu0 %v1390
        %1522 = vmatprep.subr.bf16.mxu0 %v1394
        %1523 = vmatpush1.bf16.msra.mxu0 %v1393
        %1524 = vmatprep.mubr.bf16.mxu0 %v993
        %1525 = vmatmul.mubr.bf16.gmra.mrb[0].mxu0 %v992
        %v1526 = vpop.f32.mrb[0].mxu0
        %v1527 = vadd.f32 %v1096, %v1526
        %v1528 = vpop.f32.mrb[0].mxu0
        %v1529 = vadd.f32 %v1100, %v1528
        %v1530 = vpop.f32.mrb[0].mxu0
        %v1531 = vpop.f32.mrb[0].mxu0
        %1532 = vdwg.mxu0
        %1533 = vmatprep.subr.bf16.mxu0 %v1397
        %1534 = vmatpush1.bf16.msra.mxu0 %v1396
        %1535 = vmatprep.subr.bf16.mxu0 %v1400
        %1536 = vmatpush1.bf16.msra.mxu0 %v1399
        %1537 = vmatprep.subr.bf16.mxu0 %v1403
        %1538 = vmatpush1.bf16.msra.mxu0 %v1402
        %1539 = vmatprep.subr.bf16.mxu0 %v1406
        %1540 = vmatpush1.bf16.msra.mxu0 %v1405
        %1541 = vmatprep.subr.bf16.mxu0 %v1409
        %1542 = vmatpush1.bf16.msra.mxu0 %v1408
        %1543 = vmatprep.subr.bf16.mxu0 %v1412
        %1544 = vmatpush1.bf16.msra.mxu0 %v1411
        %1545 = vmatprep.subr.bf16.mxu0 %v1415
        %1546 = vmatpush1.bf16.msra.mxu0 %v1414
        %1547 = vmatprep.subr.bf16.mxu0 %v1418
        %1548 = vmatpush1.bf16.msra.mxu0 %v1417
        %1549 = vmatprep.subr.bf16.mxu0 0
        %1550 = vmatpush1.bf16.msra.mxu0 0
        %1551 = vmatprep.subr.bf16.mxu0 0
        %1552 = vmatpush1.bf16.msra.mxu0 0
        %1553 = vmatprep.subr.bf16.mxu0 0
        %1554 = vmatpush1.bf16.msra.mxu0 0
        %1555 = vmatprep.subr.bf16.mxu0 0
        %1556 = vmatpush1.bf16.msra.mxu0 0
        %1557 = vmatprep.subr.bf16.mxu0 0
        %1558 = vmatpush1.bf16.msra.mxu0 0
        %1559 = vmatprep.subr.bf16.mxu0 0
        %1560 = vmatpush1.bf16.msra.mxu0 0
        %1561 = vmatprep.subr.bf16.mxu0 0
        %1562 = vmatpush1.bf16.msra.mxu0 0
        %1563 = vmatprep.subr.bf16.mxu0 0
        %1564 = vmatpush1.bf16.msra.mxu0 0
        %1565 = vmatprep.mubr.bf16.mxu0 0
        %1566 = vmatmul.mubr.bf16.gmra.mrb[0].mxu0 %v994
        %v1567 = vpop.f32.mrb[0].mxu0
        %v1568 = vadd.f32 %v1527, %v1567
        %v1569 = vpop.f32.mrb[0].mxu0
        %v1570 = vadd.f32 %v1529, %v1569
        %v1571 = vpop.f32.mrb[0].mxu0
        %v1572 = vpop.f32.mrb[0].mxu0
        %1573 = vdwg.mxu0
        %1574 = vmatprep.subr.bf16.mxu0 0
        %1575 = vmatpush1.bf16.msra.mxu0 %v1350
        %1576 = vmatprep.subr.bf16.mxu0 0
        %1577 = vmatpush1.bf16.msra.mxu0 %v1353
        %1578 = vmatprep.subr.bf16.mxu0 0
        %1579 = vmatpush1.bf16.msra.mxu0 %v1356
        %1580 = vmatprep.subr.bf16.mxu0 0
        %1581 = vmatpush1.bf16.msra.mxu0 %v1359
        %1582 = vmatprep.subr.bf16.mxu0 0
        %1583 = vmatpush1.bf16.msra.mxu0 %v1362
        %1584 = vmatprep.subr.bf16.mxu0 0
        %1585 = vmatpush1.bf16.msra.mxu0 %v1365
        %1586 = vmatprep.subr.bf16.mxu0 0
        %1587 = vmatpush1.bf16.msra.mxu0 %v1368
        %1588 = vmatprep.subr.bf16.mxu0 0
        %1589 = vmatpush1.bf16.msra.mxu0 %v1371
        %1590 = vmatprep.subr.bf16.mxu0 0
        %1591 = vmatpush1.bf16.msra.mxu0 %v1374
        %1592 = vmatprep.subr.bf16.mxu0 0
        %1593 = vmatpush1.bf16.msra.mxu0 %v1377
        %1594 = vmatprep.subr.bf16.mxu0 0
        %1595 = vmatpush1.bf16.msra.mxu0 %v1380
        %1596 = vmatprep.subr.bf16.mxu0 0
        %1597 = vmatpush1.bf16.msra.mxu0 %v1383
        %1598 = vmatprep.subr.bf16.mxu0 0
        %1599 = vmatpush1.bf16.msra.mxu0 %v1386
        %1600 = vmatprep.subr.bf16.mxu0 0
        %1601 = vmatpush1.bf16.msra.mxu0 %v1389
        %1602 = vmatprep.subr.bf16.mxu0 0
        %1603 = vmatpush1.bf16.msra.mxu0 %v1392
        %1604 = vmatprep.subr.bf16.mxu0 0
        %1605 = vmatpush1.bf16.msra.mxu0 %v1395
        %1606 = vmatprep.mubr.bf16.mxu0 %v993
        %1607 = vmatmul.mubr.bf16.gmra.mrb[0].mxu0 %v992
        %v1608 = vpop.f32.mrb[0].mxu0
        %v1609 = vadd.f32 %v1104, %v1608
        %v1610 = vpop.f32.mrb[0].mxu0
        %v1611 = vpop.f32.mrb[0].mxu0
        %v1612 = vpop.f32.mrb[0].mxu0
        %1613 = vdwg.mxu0
        %1614 = vmatprep.subr.bf16.mxu0 0
        %1615 = vmatpush1.bf16.msra.mxu0 %v1398
        %1616 = vmatprep.subr.bf16.mxu0 0
        %1617 = vmatpush1.bf16.msra.mxu0 %v1401
        %1618 = vmatprep.subr.bf16.mxu0 0
        %1619 = vmatpush1.bf16.msra.mxu0 %v1404
        %1620 = vmatprep.subr.bf16.mxu0 0
        %1621 = vmatpush1.bf16.msra.mxu0 %v1407
        %1622 = vmatprep.subr.bf16.mxu0 0
        %1623 = vmatpush1.bf16.msra.mxu0 %v1410
        %1624 = vmatprep.subr.bf16.mxu0 0
        %1625 = vmatpush1.bf16.msra.mxu0 %v1413
        %1626 = vmatprep.subr.bf16.mxu0 0
        %1627 = vmatpush1.bf16.msra.mxu0 %v1416
        %1628 = vmatprep.subr.bf16.mxu0 0
        %1629 = vmatpush1.bf16.msra.mxu0 %v1419
        %1630 = vmatprep.subr.bf16.mxu0 0
        %1631 = vmatpush1.bf16.msra.mxu0 0
        %1632 = vmatprep.subr.bf16.mxu0 0
        %1633 = vmatpush1.bf16.msra.mxu0 0
        %1634 = vmatprep.subr.bf16.mxu0 0
        %1635 = vmatpush1.bf16.msra.mxu0 0
        %1636 = vmatprep.subr.bf16.mxu0 0
        %1637 = vmatpush1.bf16.msra.mxu0 0
        %1638 = vmatprep.subr.bf16.mxu0 0
        %1639 = vmatpush1.bf16.msra.mxu0 0
        %1640 = vmatprep.subr.bf16.mxu0 0
        %1641 = vmatpush1.bf16.msra.mxu0 0
        %1642 = vmatprep.subr.bf16.mxu0 0
        %1643 = vmatpush1.bf16.msra.mxu0 0
        %1644 = vmatprep.subr.bf16.mxu0 0
        %1645 = vmatpush1.bf16.msra.mxu0 0
        %1646 = vmatprep.mubr.bf16.mxu0 0
        %1647 = vmatmul.mubr.bf16.gmra.mrb[0].mxu0 %v994
        %v1648 = vpop.f32.mrb[0].mxu0
        %v1649 = vadd.f32 %v1609, %v1648
        %v1650 = vpop.f32.mrb[0].mxu0
        %v1651 = vpop.f32.mrb[0].mxu0
        %v1652 = vpop.f32.mrb[0].mxu0
        %1653 = vdwg.mxu0
        %v1654 = vxor.u32 %v1568, 2147483648
        %v1655 = vxor.u32 %v1570, 2147483648
        %v1656 = vxor.u32 %v1649, 2147483648
        %v1657 = vmul.f32 %v1654, 1.442695
        %v1658 = vpow.pop %v1657
        %v1659 = vmul.f32 %v1655, 1.442695
        %v1660 = vpow.pop %v1659
        %v1661 = vmul.f32 %v1656, 1.442695
        %v1662 = vpow.pop %v1661
        %v1663 = vadd.f32 %v1658, 1.0
        %v1664 = vadd.f32 %v1660, 1.0
        %v1665 = vadd.f32 %v1662, 1.0
        %v1666 = vrcp.pop %v1663
        %v1667 = vmul.f32 1.0, %v1666
        %v1668 = vrcp.pop %v1664
        %v1669 = vmul.f32 1.0, %v1668
        %v1670 = vrcp.pop %v1665
        %v1671 = vmul.f32 1.0, %v1670
        %v1672 = vpack.c.bf16 %v1667, %v1667
        %v1673 = vpack.c.bf16 %v1669, %v1669
        %v1674 = vpack.c.bf16 %v1671, %v1671
        %v1675 = vld [vmem:[#allocation7] sm:$0xf]
        %v1676 = vld [vmem:[#allocation7 + $0x4] sm:$0xf]
        %v1677 = vld [vmem:[#allocation7 + $0x8] sm:$0xf]
        %v1678 = vld [vmem:[#allocation7 + $0xc] sm:$0xf]
        %v1679 = vld [vmem:[#allocation7 + $0x10] sm:$0xf]
        %v1680 = vld [vmem:[#allocation7 + $0x14] sm:$0xf]
        %v1681 = vld [vmem:[#allocation7 + $0x18] sm:$0xf]
        %v1682 = vld [vmem:[#allocation7 + $0x1c] sm:$0xf]
        %v1683 = vld [vmem:[#allocation7 + $0x20] sm:$0xf]
        %v1684 = vld [vmem:[#allocation7 + $0x24] sm:$0xf]
        %v1685 = vld [vmem:[#allocation7 + $0x28] sm:$0xf]
        %v1686 = vld [vmem:[#allocation7 + $0x2c] sm:$0xf]
        %v1687 = vld [vmem:[#allocation7 + $0x30] sm:$0xf]
        %v1688 = vld [vmem:[#allocation7 + $0x34] sm:$0xf]
        %v1689 = vld [vmem:[#allocation7 + $0x38] sm:$0xf]
        %v1690 = vld [vmem:[#allocation7 + $0x3c] sm:$0xf]
        %v1691 = vld [vmem:[#allocation7 + $0x40] sm:$0xf]
        %v1692 = vld [vmem:[#allocation7 + $0x44] sm:$0xf]
        %v1693 = vld [vmem:[#allocation7 + $0x48] sm:$0xf]
        %v1694 = vld [vmem:[#allocation7 + $0x4c] sm:$0xf]
        %v1695 = vld [vmem:[#allocation7 + $0x50] sm:$0xf]
        %v1696 = vld [vmem:[#allocation7 + $0x54] sm:$0xf]
        %v1697 = vld [vmem:[#allocation7 + $0x58] sm:$0xf]
        %v1698 = vld [vmem:[#allocation7 + $0x5c] sm:$0xf]
        %v1699 = vld [vmem:[#allocation7 + $0x60] sm:$0xf]
        %v1700 = vld [vmem:[#allocation7 + $0x64] sm:$0xf]
        %v1701 = vld [vmem:[#allocation7 + $0x68] sm:$0xf]
        %v1702 = vld [vmem:[#allocation7 + $0x6c] sm:$0xf]
        %v1703 = vld [vmem:[#allocation7 + $0x70] sm:$0xf]
        %v1704 = vld [vmem:[#allocation7 + $0x74] sm:$0xf]
        %v1705 = vld [vmem:[#allocation7 + $0x78] sm:$0xf]
        %v1706 = vld [vmem:[#allocation7 + $0x7c] sm:$0xf]
        %v1707 = vld [vmem:[#allocation7 + $0x80] sm:$0xf]
        %v1708 = vld [vmem:[#allocation7 + $0x84] sm:$0xf]
        %v1709 = vld [vmem:[#allocation7 + $0x88] sm:$0xf]
        %v1710 = vld [vmem:[#allocation7 + $0x8c] sm:$0xf]
        %v1711 = vld [vmem:[#allocation7 + $0x90] sm:$0xf]
        %v1712 = vld [vmem:[#allocation7 + $0x94] sm:$0xf]
        %v1713 = vld [vmem:[#allocation7 + $0x98] sm:$0xf]
        %v1714 = vld [vmem:[#allocation7 + $0x9c] sm:$0xf]
        %v1715 = vld [vmem:[#allocation7 + $0xa0] sm:$0xf]
        %v1716 = vld [vmem:[#allocation7 + $0xa4] sm:$0xf]
        %v1717 = vld [vmem:[#allocation7 + $0xa8] sm:$0xf]
        %v1718 = vld [vmem:[#allocation7 + $0xac] sm:$0xf]
        %v1719 = vld [vmem:[#allocation7 + $0xb0] sm:$0xf]
        %v1720 = vld [vmem:[#allocation7 + $0xb4] sm:$0xf]
        %v1721 = vld [vmem:[#allocation7 + $0xb8] sm:$0xf]
        %v1722 = vld [vmem:[#allocation7 + $0xbc] sm:$0xf]
        %v1723 = vld [vmem:[%s6] sm:$0x1]
        %v1725 = vlaneseq
        %v1726 = vshrl.u32 %v1725, 7
        %v1727 = vsub.s32 0, %v1726
        %v1728 = vrot.slane %v1723, %v1727
        %v1778 = vunpack.c.l.b16 %v1675
        %v1779 = vunpack.c.l.b16 %v1676
        %v1780 = vunpack.c.l.b16 %v1677
        %v1781 = vunpack.c.l.b16 %v1678
        %v1782 = vunpack.c.l.b16 %v1679
        %v1783 = vunpack.c.l.b16 %v1680
        %v1784 = vunpack.c.l.b16 %v1681
        %v1785 = vunpack.c.l.b16 %v1682
        %v1786 = vunpack.c.l.b16 %v1683
        %v1787 = vunpack.c.l.b16 %v1684
        %v1788 = vunpack.c.l.b16 %v1685
        %v1789 = vunpack.c.l.b16 %v1686
        %v1790 = vunpack.c.l.b16 %v1687
        %v1791 = vunpack.c.l.b16 %v1688
        %v1792 = vunpack.c.l.b16 %v1689
        %v1793 = vunpack.c.l.b16 %v1690
        %v1794 = vunpack.c.l.b16 %v1691
        %v1795 = vunpack.c.l.b16 %v1692
        %v1796 = vunpack.c.l.b16 %v1693
        %v1797 = vunpack.c.l.b16 %v1694
        %v1798 = vunpack.c.l.b16 %v1695
        %v1799 = vunpack.c.l.b16 %v1696
        %v1800 = vunpack.c.l.b16 %v1697
        %v1801 = vunpack.c.l.b16 %v1698
        %v1802 = vunpack.c.l.b16 %v1699
        %v1803 = vunpack.c.l.b16 %v1700
        %v1804 = vunpack.c.l.b16 %v1701
        %v1805 = vunpack.c.l.b16 %v1702
        %v1806 = vunpack.c.l.b16 %v1703
        %v1807 = vunpack.c.l.b16 %v1704
        %v1808 = vunpack.c.l.b16 %v1705
        %v1809 = vunpack.c.l.b16 %v1706
        %v1810 = vunpack.c.l.b16 %v1707
        %v1811 = vunpack.c.l.b16 %v1708
        %v1812 = vunpack.c.l.b16 %v1709
        %v1813 = vunpack.c.l.b16 %v1710
        %v1814 = vunpack.c.l.b16 %v1711
        %v1815 = vunpack.c.l.b16 %v1712
        %v1816 = vunpack.c.l.b16 %v1713
        %v1817 = vunpack.c.l.b16 %v1714
        %v1818 = vunpack.c.l.b16 %v1715
        %v1819 = vunpack.c.l.b16 %v1716
        %v1820 = vunpack.c.l.b16 %v1717
        %v1821 = vunpack.c.l.b16 %v1718
        %v1822 = vunpack.c.l.b16 %v1719
        %v1823 = vunpack.c.l.b16 %v1720
        %v1824 = vunpack.c.l.b16 %v1721
        %v1825 = vunpack.c.l.b16 %v1722
        %v1826 = vpack.c.b16 %v1779, %v1778
        %v1827 = vpack.c.b16 %v1781, %v1780
        %v1828 = vpack.c.b16 %v1783, %v1782
        %v1829 = vpack.c.b16 %v1785, %v1784
        %v1830 = vpack.c.b16 %v1787, %v1786
        %v1831 = vpack.c.b16 %v1789, %v1788
        %v1832 = vpack.c.b16 %v1791, %v1790
        %v1833 = vpack.c.b16 %v1793, %v1792
        %v1834 = vpack.c.b16 %v1795, %v1794
        %v1835 = vpack.c.b16 %v1797, %v1796
        %v1836 = vpack.c.b16 %v1799, %v1798
        %v1837 = vpack.c.b16 %v1801, %v1800
        %v1838 = vpack.c.b16 %v1803, %v1802
        %v1839 = vpack.c.b16 %v1805, %v1804
        %v1840 = vpack.c.b16 %v1807, %v1806
        %v1841 = vpack.c.b16 %v1809, %v1808
        %v1842 = vpack.c.b16 %v1811, %v1810
        %v1843 = vpack.c.b16 %v1813, %v1812
        %v1844 = vpack.c.b16 %v1815, %v1814
        %v1845 = vpack.c.b16 %v1817, %v1816
        %v1846 = vpack.c.b16 %v1819, %v1818
        %v1847 = vpack.c.b16 %v1821, %v1820
        %v1848 = vpack.c.b16 %v1823, %v1822
        %v1849 = vpack.c.b16 %v1825, %v1824
        %1874 = vmatprep.subr.bf16.mxu0 0
        %1875 = vmatpush1.bf16.msra.mxu0 %v1826
        %1876 = vmatprep.subr.bf16.mxu0 0
        %1877 = vmatpush1.bf16.msra.mxu0 %v1827
        %1878 = vmatprep.subr.bf16.mxu0 0
        %1879 = vmatpush1.bf16.msra.mxu0 %v1828
        %1880 = vmatprep.subr.bf16.mxu0 0
        %1881 = vmatpush1.bf16.msra.mxu0 %v1829
        %1882 = vmatprep.subr.bf16.mxu0 0
        %1883 = vmatpush1.bf16.msra.mxu0 %v1830
        %1884 = vmatprep.subr.bf16.mxu0 0
        %1885 = vmatpush1.bf16.msra.mxu0 %v1831
        %1886 = vmatprep.subr.bf16.mxu0 0
        %1887 = vmatpush1.bf16.msra.mxu0 %v1832
        %1888 = vmatprep.subr.bf16.mxu0 0
        %1889 = vmatpush1.bf16.msra.mxu0 %v1833
        %1890 = vmatprep.subr.bf16.mxu0 0
        %1891 = vmatpush1.bf16.msra.mxu0 %v1834
        %1892 = vmatprep.subr.bf16.mxu0 0
        %1893 = vmatpush1.bf16.msra.mxu0 %v1835
        %1894 = vmatprep.subr.bf16.mxu0 0
        %1895 = vmatpush1.bf16.msra.mxu0 %v1836
        %1896 = vmatprep.subr.bf16.mxu0 0
        %1897 = vmatpush1.bf16.msra.mxu0 %v1837
        %1898 = vmatprep.subr.bf16.mxu0 0
        %1899 = vmatpush1.bf16.msra.mxu0 %v1838
        %1900 = vmatprep.subr.bf16.mxu0 0
        %1901 = vmatpush1.bf16.msra.mxu0 %v1839
        %1902 = vmatprep.subr.bf16.mxu0 0
        %1903 = vmatpush1.bf16.msra.mxu0 %v1840
        %1904 = vmatprep.subr.bf16.mxu0 0
        %1905 = vmatpush1.bf16.msra.mxu0 %v1841
        %1906 = vmatprep.mubr.bf16.mxu0 %v1673
        %1907 = vmatmul.mubr.bf16.gmra.mrb[0].mxu0 %v1672
        %v1908 = vpop.f32.mrb[0].mxu0
        %v1909 = vadd.f32 %v1728, %v1908
        %v1910 = vpop.f32.mrb[0].mxu0
        %v1911 = vpop.f32.mrb[0].mxu0
        %v1912 = vpop.f32.mrb[0].mxu0
        %1913 = vdwg.mxu0
        %1914 = vmatprep.subr.bf16.mxu0 0
        %1915 = vmatpush1.bf16.msra.mxu0 %v1842
        %1916 = vmatprep.subr.bf16.mxu0 0
        %1917 = vmatpush1.bf16.msra.mxu0 %v1843
        %1918 = vmatprep.subr.bf16.mxu0 0
        %1919 = vmatpush1.bf16.msra.mxu0 %v1844
        %1920 = vmatprep.subr.bf16.mxu0 0
        %1921 = vmatpush1.bf16.msra.mxu0 %v1845
        %1922 = vmatprep.subr.bf16.mxu0 0
        %1923 = vmatpush1.bf16.msra.mxu0 %v1846
        %1924 = vmatprep.subr.bf16.mxu0 0
        %1925 = vmatpush1.bf16.msra.mxu0 %v1847
        %1926 = vmatprep.subr.bf16.mxu0 0
        %1927 = vmatpush1.bf16.msra.mxu0 %v1848
        %1928 = vmatprep.subr.bf16.mxu0 0
        %1929 = vmatpush1.bf16.msra.mxu0 %v1849
        %1930 = vmatprep.subr.bf16.mxu0 0
        %1931 = vmatpush1.bf16.msra.mxu0 0
        %1932 = vmatprep.subr.bf16.mxu0 0
        %1933 = vmatpush1.bf16.msra.mxu0 0
        %1934 = vmatprep.subr.bf16.mxu0 0
        %1935 = vmatpush1.bf16.msra.mxu0 0
        %1936 = vmatprep.subr.bf16.mxu0 0
        %1937 = vmatpush1.bf16.msra.mxu0 0
        %1938 = vmatprep.subr.bf16.mxu0 0
        %1939 = vmatpush1.bf16.msra.mxu0 0
        %1940 = vmatprep.subr.bf16.mxu0 0
        %1941 = vmatpush1.bf16.msra.mxu0 0
        %1942 = vmatprep.subr.bf16.mxu0 0
        %1943 = vmatpush1.bf16.msra.mxu0 0
        %1944 = vmatprep.subr.bf16.mxu0 0
        %1945 = vmatpush1.bf16.msra.mxu0 0
        %1946 = vmatprep.mubr.bf16.mxu0 0
        %1947 = vmatmul.mubr.bf16.gmra.mrb[0].mxu0 %v1674
        %v1948 = vpop.f32.mrb[0].mxu0
        %v1949 = vadd.f32 %v1909, %v1948
        %v1950 = vpop.f32.mrb[0].mxu0
        %v1951 = vpop.f32.mrb[0].mxu0
        %v1952 = vpop.f32.mrb[0].mxu0
        %1953 = vdwg.mxu0
        %1954 = vst [vmem:[%s372] sm:$0xff] %v1949
        %1955 = vmax.xlane.f32.xlu0 %v1949
        %v1956 = vpop.xlane.xlu0 %1955
        %v1957 = vsub.f32 %v1949, %v1956
        %v1958 = vmul.f32 %v1957, 1.442695
        %v1959 = vpow.pop %v1958
        %1960 = vadd.xlane.f32.xlu0 %v1959
        %v1961 = vpop.xlane.xlu0 %1960
        %v1962 = vrcp.pop %v1961
        %v1963 = vmul.f32 %v1959, %v1962
        %1964 = vst [vmem:[%s376] sm:$0xff] %v1963
        %p1965 = scmp.lt.s32.totalorder %s25, 1
        %s1966 = scalar_select %p1965, %s25, 1
        %s1967 = smul.addr %s1966, 8
        %s1968 = scalar_lea.vmem %s7, %s1967
        %p1969 = scmp.lt.s32.totalorder %s25, 1
        %s1970 = scalar_select %p1969, %s25, 1
        %s1971 = smul.addr %s1970, 8
        %s1972 = scalar_lea.vmem %s8, %s1971
        // Predicated region
        $region65: #{classify_forward.1} parent=47 // pred_check
          %p1973 = pneg %p195
        $region66: #{classify_forward.1} parent=47 // pred_check_branch
          %1975 = sbr.rel (%p1973) target = $region68
        $region67: #{classify_forward.1} parent=47 // pred_region
          _
        $region68: #{classify_forward.1} parent=47 // pred_fallthru
          _
        // Predicated region
        $region69: #{classify_forward.1} parent=47 // pred_check
          %p1976 = pneg %p221
        $region70: #{classify_forward.1} parent=47 // pred_check_branch
          %1978 = sbr.rel (%p1976) target = $region72
        $region71: #{classify_forward.1} parent=47 // pred_region
          _
        $region72: #{classify_forward.1} parent=47 // pred_fallthru
          _
      $region48: #{classify_forward.1} parent=5 // pred_fallthru
        _
      %p1979 = scmp.le.s32.totalorder 2, %s20
      // Predicated region
      $region73: #{classify_forward.1} parent=5 // pred_check
        %p1980 = pneg %p1979
      $region74: #{classify_forward.1} parent=5 // pred_check_branch
        %1982 = sbr.rel (%p1980) target = $region76
      $region75: #{classify_forward.1} parent=5 // pred_region
        %s1983 = ssub.s32 %s20, 2
        // Predicated region
        $region77: #{classify_forward.1} parent=75 // pred_check
          %p1984 = pneg %p201
        $region78: #{classify_forward.1} parent=75 // pred_check_branch
          %1986 = sbr.rel (%p1984) target = $region80
        $region79: #{classify_forward.1} parent=75 // pred_region
          %p1987 = scmp.lt.s32.totalorder %s26, 1
          %s1988 = scalar_select %p1987, %s26, 1
          %s1989 = smul.addr %s1988, 8
          %s1990 = scalar_lea.vmem %s7, %s1989
        $region80: #{classify_forward.1} parent=75 // pred_fallthru
          _
        // Predicated region
        $region81: #{classify_forward.1} parent=75 // pred_check
          %p1991 = pneg %p227
        $region82: #{classify_forward.1} parent=75 // pred_check_branch
          %1993 = sbr.rel (%p1991) target = $region84
        $region83: #{classify_forward.1} parent=75 // pred_region
          %p1994 = scmp.lt.s32.totalorder %s26, 1
          %s1995 = scalar_select %p1994, %s26, 1
          %s1996 = smul.addr %s1995, 8
          %s1997 = scalar_lea.vmem %s8, %s1996
        $region84: #{classify_forward.1} parent=75 // pred_fallthru
          _
      $region76: #{classify_forward.1} parent=5 // pred_fallthru
        _
    $region6: #{classify_forward.1} parent=1 // loop_footer
      %s24 = sadd.s32 1, %s20
    $region7: #{classify_forward.1} parent=1 // loop_footer_branch
      %19 = sbr.rel target = $region3
    $region8: #{classify_forward.1} parent=1 // loop_exit
      _
    %1998 = vsyncpa [#allocation3], 1
    %s1999 = scalar_lea.sflag [#allocation3], 1
    %2000 = vsyncpa %s1999, 1
    %2001 = vsyncpa [#allocation5], 1
    %2002 = vsyncpa [#allocation8], 1

</llo_original>
